<compile_context>
chip_gen: v7x
topology: tpu7x:2x2x1
jax: 0.10.0
libtpu: 0.0.40
codegen_flags: <defaults>
</compile_context>

<pallas_src>
import functools

import jax
import jax.numpy as jnp
from jax.experimental import pallas as pl
from jax.experimental.pallas import tpu as pltpu

INPUT = 16 * 4 * 4   # 256  (nn.LSTM input_size)
HIDDEN = 96          # nn.LSTM hidden_size
HP = 128             # lane-padded hidden size used inside the kernel
FC1 = 48
FCP = 128            # lane-padded fc1 width
NCLASS = 8
OUTP = 128           # lane-padded output width (lane-dense store)
NEG = -1e30          # padding bias for the softmax logits


def _lstm_head_kernel(x_ref, w_ih_ref, w_hh_ref, b_ref,
                      w1_ref, b1_ref, w2_ref, b2_ref, out_ref, xw_ref,
                      *, act_dtype):
    T, BB, D = x_ref.shape

    # ---- hoisted input projection: one big MXU matmul over all timesteps ---
    # x arrives time-major (T, bb, D); the projection is stored time-major in
    # VMEM scratch so every recurrence step reads a contiguous slab xw_ref[t].
    x2d = x_ref[...].reshape(T * BB, D)
    xw = jnp.dot(x2d, w_ih_ref[...], preferred_element_type=jnp.float32)
    xw_ref[...] = (xw + b_ref[...]).reshape(T, BB, 4 * HP)   # bias folded once

    w_hh = w_hh_ref[...]
    h0 = jnp.zeros((BB, HP), jnp.float32)
    c0 = jnp.zeros((BB, HP), jnp.float32)

    def sig(v):
        # sigmoid via tanh: one EUP op instead of exp + reciprocal.
        return 0.5 * jnp.tanh(0.5 * v) + 0.5

    # gates layout (lane-padded): [i | f | g | o], each HP wide.  Padded lanes
    # have zero weights/bias -> i=f=o=0.5, g=0 -> c_pad = h_pad = 0 forever.
    def step(t, h, c):
        gates = xw_ref[t] + jnp.dot(h.astype(w_hh.dtype), w_hh,
                                    preferred_element_type=jnp.float32)
        ga = gates.astype(act_dtype)
        i = sig(ga[:, 0 * HP:1 * HP])
        f = sig(ga[:, 1 * HP:2 * HP])
        g = jnp.tanh(ga[:, 2 * HP:3 * HP])
        o = sig(ga[:, 3 * HP:4 * HP])
        c = f * c + (i * g).astype(jnp.float32)              # c carried in f32
        h = (o * jnp.tanh(c.astype(act_dtype))).astype(jnp.float32)
        return h, c

    if T <= 16:
        # full unroll: small, static trip count — max LLO scheduling window
        h, c = h0, c0
        for t in range(T):
            h, c = step(t, h, c)
    else:
        # large T: bounded live ranges, short unroll, dynamic read of scratch
        def body(t, carry):
            return step(t, *carry)
        h, c = jax.lax.fori_loop(0, T, body, (h0, c0), unroll=2)

    # ---- head: fc1 -> relu -> (dropout == identity in eval) -> fc2 -> softmax
    s = jnp.maximum(
        jnp.dot(h, w1_ref[...], preferred_element_type=jnp.float32) + b1_ref[...],
        0.0)
    # TODO(synk): nn.Dropout(0.5) is identity in eval mode; training-mode RNG
    # mask (pltpu.prng_seed / prng_random_bits) not implemented.
    logits = jnp.dot(s, w2_ref[...], preferred_element_type=jnp.float32) + b2_ref[...]
    # padded logit columns carry bias -1e30 -> exp underflows to exactly 0, so
    # the 128-lane softmax equals the 8-class softmax and the store is
    # lane-dense / unmasked.  Exact division keeps sum(probs) == 1.
    m = jnp.max(logits, axis=-1, keepdims=True)
    e = jnp.exp(logits - m)
    out_ref[...] = (e / jnp.sum(e, axis=-1, keepdims=True)).astype(out_ref.dtype)


def _round_up(v, m):
    return -(-v // m) * m


def lstm_module_forward(x, padded_params, *, compute_dtype=jnp.float32,
                        act_dtype=jnp.float32, batch_block=128,
                        target_blocks=1, vmem_budget_bytes=40 * 1024 * 1024):
    """x: (B, T, INPUT) float32 -> softmax scores (B, NCLASS).

    compute_dtype: MXU operand dtype for x / LSTM weights (bf16 is a free
                   speedup on all generations; accumulation stays f32).
    act_dtype:     gate-nonlinearity dtype.  Use bf16 only on v6e/v7x
                   (native bf16 EUP/VPU); keep f32 on v5e.
    target_blocks: set >= 2 on v7x so the batch splits across both TensorCores.
    """
    w_ih, w_hh, b, w1, b1, w2, b2 = padded_params
    B, T, D = x.shape
    assert D == INPUT

    xb = jnp.dtype(compute_dtype).itemsize
    sub = 8 * (4 // xb)                       # sublane quantum: 8 (f32) / 16 (bf16)

    # ---- choose the batch block against the VMEM budget (T-aware) ----------
    def vmem_estimate(bb):
        x_bytes = 2 * T * bb * D * xb                       # double-buffered x
        xw_bytes = T * bb * 4 * HP * 4                      # time-major scratch
        w_bytes = 2 * ((D + HP) * 4 * HP * xb
                       + (HP + FCP) * FCP * 4
                       + 4 * (4 * HP + FCP + OUTP))         # resident weights
        out_bytes = 2 * bb * OUTP * 4
        work = 2 * T * bb * 4 * HP * 4                      # in-body temporaries
        return x_bytes + xw_bytes + w_bytes + out_bytes + work

    BPmin = _round_up(max(B, sub), sub)
    bb = max(sub, (min(batch_block, BPmin) // sub) * sub)
    if target_blocks > 1:                                   # v7x: >=2 parallel blocks
        bb = min(bb, max(sub, _round_up(-(-BPmin // target_blocks), sub)))
    while bb > sub and vmem_estimate(bb) > vmem_budget_bytes:
        bb -= sub
    BP = _round_up(BPmin, bb)
    vmem_limit = int(min(60 * 1024 * 1024,
                         max(32 * 1024 * 1024, 3 * vmem_estimate(bb) // 2)))

    # ---- prepare x: cast early (halves DMA for bf16), pad batch, time-major -
    x_in = x.astype(compute_dtype)
    if BP != B:
        x_in = jnp.zeros((BP, T, D), x_in.dtype).at[:B].set(x_in)
    x_tm = jnp.transpose(x_in, (1, 0, 2))                   # (T, BP, D), as the module's permute

    w_ih_c = w_ih.astype(compute_dtype)
    w_hh_c = w_hh.astype(compute_dtype)

    kernel = functools.partial(_lstm_head_kernel, act_dtype=act_dtype)

    out = pl.pallas_call(
        kernel,
        out_shape=jax.ShapeDtypeStruct((BP, OUTP), jnp.float32),
        grid_spec=pltpu.PrefetchScalarGridSpec(
            num_scalar_prefetch=0,
            grid=(BP // bb,),                                     # batch blocks
            in_specs=[
                pl.BlockSpec((T, bb, D), lambda i: (0, i, 0)),    # x (time-major)
                pl.BlockSpec((D, 4 * HP), lambda i: (0, 0)),      # W_ih^T (padded)
                pl.BlockSpec((HP, 4 * HP), lambda i: (0, 0)),     # W_hh^T (padded)
                pl.BlockSpec((1, 4 * HP), lambda i: (0, 0)),      # b_ih + b_hh (padded)
                pl.BlockSpec((HP, FCP), lambda i: (0, 0)),        # fc1 W^T (padded)
                pl.BlockSpec((1, FCP), lambda i: (0, 0)),         # fc1 b (padded)
                pl.BlockSpec((FCP, OUTP), lambda i: (0, 0)),      # fc2 W^T (padded)
                pl.BlockSpec((1, OUTP), lambda i: (0, 0)),        # fc2 b (padded, -1e30)
            ],
            out_specs=pl.BlockSpec((bb, OUTP), lambda i: (i, 0)), # lane-dense store
            scratch_shapes=[pltpu.VMEM((T, bb, 4 * HP), jnp.float32)],
        ),
        compiler_params=pltpu.CompilerParams(
            dimension_semantics=("parallel",),
            vmem_limit_bytes=vmem_limit),
    )(x_tm, w_ih_c, w_hh_c, b, w1, b1, w2, b2)
    return out[:B, :NCLASS]


# ---------------- parameter construction (deterministic, PyTorch-style) -----

def _pad_gate_cols(w, h, hp):
    """(rows, 4h) -> (rows, 4hp): each gate block placed at k*hp, zero pad."""
    rows = w.shape[0]
    out = jnp.zeros((rows, 4 * hp), w.dtype)
    for k in range(4):
        out = out.at[:, k * hp:k * hp + h].set(w[:, k * h:(k + 1) * h])
    return out


def _pad_to(a, shape, fill=0.0):
    out = jnp.full(shape, fill, a.dtype)
    return out.at[tuple(slice(0, s) for s in a.shape)].set(a)


def make_params(key):
    ks = jax.random.split(key, 8)
    bl = 1.0 / (HIDDEN ** 0.5)
    # PyTorch nn.LSTM layout: weight_ih (4H, D), weight_hh (4H, H), gate order i,f,g,o
    w_ih_pt = jax.random.uniform(ks[0], (4 * HIDDEN, INPUT), jnp.float32, -bl, bl)
    w_hh_pt = jax.random.uniform(ks[1], (4 * HIDDEN, HIDDEN), jnp.float32, -bl, bl)
    b_ih = jax.random.uniform(ks[2], (4 * HIDDEN,), jnp.float32, -bl, bl)
    b_hh = jax.random.uniform(ks[3], (4 * HIDDEN,), jnp.float32, -bl, bl)
    b1l = 1.0 / (HIDDEN ** 0.5)
    w1_pt = jax.random.uniform(ks[4], (FC1, HIDDEN), jnp.float32, -b1l, b1l)
    b1 = jax.random.uniform(ks[5], (FC1,), jnp.float32, -b1l, b1l)
    b2l = 1.0 / (FC1 ** 0.5)
    w2_pt = jax.random.uniform(ks[6], (NCLASS, FC1), jnp.float32, -b2l, b2l)
    b2 = jax.random.uniform(ks[7], (NCLASS,), jnp.float32, -b2l, b2l)

    # unpadded, transposed (for the pure-JAX reference)
    ref_params = (w_ih_pt.T, w_hh_pt.T, (b_ih + b_hh)[None, :],
                  w1_pt.T, b1[None, :], w2_pt.T, b2[None, :])

    # lane-padded versions for the kernel
    pad_params = (
        _pad_gate_cols(w_ih_pt.T, HIDDEN, HP),                            # (D, 4HP)
        _pad_to(_pad_gate_cols(w_hh_pt.T, HIDDEN, HP), (HP, 4 * HP)),     # (HP, 4HP)
        _pad_gate_cols((b_ih + b_hh)[None, :], HIDDEN, HP),               # (1, 4HP)
        _pad_to(w1_pt.T, (HP, FCP)),                                      # (HP, FCP)
        _pad_to(b1[None, :], (1, FCP)),                                   # (1, FCP)
        _pad_to(w2_pt.T, (FCP, OUTP)),                                    # (FCP, OUTP)
        _pad_to(b2[None, :], (1, OUTP), fill=NEG),                        # (1, OUTP)
    )
    return ref_params, pad_params


def reference_forward(x, ref_params):
    w_ih, w_hh, b, w1, b1, w2, b2 = ref_params
    xt = jnp.transpose(x, (1, 0, 2))
    B = x.shape[0]
    h0 = jnp.zeros((B, HIDDEN), jnp.float32)
    c0 = jnp.zeros((B, HIDDEN), jnp.float32)

    def step(carry, x_t):
        h, c = carry
        gates = x_t @ w_ih + h @ w_hh + b
        i = jax.nn.sigmoid(gates[:, 0:HIDDEN])
        f = jax.nn.sigmoid(gates[:, HIDDEN:2 * HIDDEN])
        g = jnp.tanh(gates[:, 2 * HIDDEN:3 * HIDDEN])
        o = jax.nn.sigmoid(gates[:, 3 * HIDDEN:4 * HIDDEN])
        c = f * c + i * g
        h = o * jnp.tanh(c)
        return (h, c), None

    (h, _), _ = jax.lax.scan(step, (h0, c0), xt)
    s = jnp.maximum(h @ w1 + b1, 0.0)
    logits = s @ w2 + b2
    return jax.nn.softmax(logits, axis=-1)


if __name__ == "__main__":
    key = jax.random.PRNGKey(0)
    pkey, xkey = jax.random.split(key)
    ref_params, pad_params = make_params(pkey)

    # padded-lane invariance guards (padded gate bias cols and W_hh rows are 0)
    w_hh_p, b_p = pad_params[1], pad_params[2]
    assert bool(jnp.all(w_hh_p[HIDDEN:HP, :] == 0))
    for k in range(4):
        assert bool(jnp.all(w_hh_p[:, k * HP + HIDDEN:(k + 1) * HP] == 0))
        assert bool(jnp.all(b_p[:, k * HP + HIDDEN:(k + 1) * HP] == 0))

    B, T = 2, 8
    x = jax.random.normal(xkey, (B, T, INPUT), jnp.float32)

    ref = jax.block_until_ready(reference_forward(x, ref_params))

    # f32 path (exact softmax normalisation -> probabilities sum to 1)
    out = jax.block_until_ready(lstm_module_forward(x, pad_params))
    assert out.shape == (B, NCLASS)
    assert jnp.allclose(jnp.sum(out, axis=-1), 1.0, atol=1e-4)
    assert jnp.allclose(out, ref, atol=2e-3, rtol=2e-3)

    # bf16 MXU-operand + bf16 gate-activation path (v6e/v7x fast path);
    # f32 accumulation and f32 c/h carries kept inside the kernel.
    out_bf16 = jax.block_until_ready(
        lstm_module_forward(x, pad_params, compute_dtype=jnp.bfloat16,
                            act_dtype=jnp.bfloat16))
    assert out_bf16.shape == (B, NCLASS)
    assert jnp.allclose(jnp.sum(out_bf16, axis=-1), 1.0, atol=1e-3)
    assert jnp.allclose(out_bf16, ref, atol=5e-2, rtol=5e-2)

    print("KERNEL_OK")
</pallas_src>

<mosaic_0001>
module attributes {stable_mosaic.version = 11 : i64} {
  func.func @_lstm_head_kernel(%arg0: i32, %arg1: memref<8x8x256xf32, #tpu.memory_space<vmem>>, %arg2: memref<256x512xf32, #tpu.memory_space<vmem>>, %arg3: memref<128x512xf32, #tpu.memory_space<vmem>>, %arg4: memref<1x512xf32, #tpu.memory_space<vmem>>, %arg5: memref<128x128xf32, #tpu.memory_space<vmem>>, %arg6: memref<1x128xf32, #tpu.memory_space<vmem>>, %arg7: memref<128x128xf32, #tpu.memory_space<vmem>>, %arg8: memref<1x128xf32, #tpu.memory_space<vmem>>, %arg9: memref<8x128xf32, #tpu.memory_space<vmem>>, %arg10: memref<8x8x512xf32, #tpu.memory_space<vmem>>) attributes {dimension_semantics = [#tpu.dimension_semantics<parallel>], iteration_bounds = array<i64: 1>, scalar_prefetch = 0 : i64, scratch_operands = 1 : i64, tpu.core_type = #tpu.core_type<tc>, window_params = [{transform_indices = @transform_0, window_bounds = array<i64: 8, 8, 256>}, {pipeline_mode = #tpu.pipeline_mode<synchronous>, transform_indices = @transform_1, window_bounds = array<i64: 256, 512>}, {pipeline_mode = #tpu.pipeline_mode<synchronous>, transform_indices = @transform_2, window_bounds = array<i64: 128, 512>}, {pipeline_mode = #tpu.pipeline_mode<synchronous>, transform_indices = @transform_3, window_bounds = array<i64: 1, 512>}, {pipeline_mode = #tpu.pipeline_mode<synchronous>, transform_indices = @transform_4, window_bounds = array<i64: 128, 128>}, {pipeline_mode = #tpu.pipeline_mode<synchronous>, transform_indices = @transform_5, window_bounds = array<i64: 1, 128>}, {pipeline_mode = #tpu.pipeline_mode<synchronous>, transform_indices = @transform_6, window_bounds = array<i64: 128, 128>}, {pipeline_mode = #tpu.pipeline_mode<synchronous>, transform_indices = @transform_7, window_bounds = array<i64: 1, 128>}, {transform_indices = @transform_8, window_bounds = array<i64: 8, 128>}]} {
    %c0 = arith.constant 0 : index
    %c0_0 = arith.constant 0 : index
    %c0_1 = arith.constant 0 : index
    %0 = vector.load %arg1[%c0, %c0_0, %c0_1] : memref<8x8x256xf32, #tpu.memory_space<vmem>>, vector<8x8x256xf32>
    %1 = vector.shape_cast %0 : vector<8x8x256xf32> to vector<64x256xf32>
    %c0_2 = arith.constant 0 : index
    %c0_3 = arith.constant 0 : index
    %2 = vector.load %arg2[%c0_2, %c0_3] : memref<256x512xf32, #tpu.memory_space<vmem>>, vector<256x512xf32>
    %cst = arith.constant dense<0.000000e+00> : vector<64x512xf32>
    %3 = tpu.matmul %1, %2, %cst {dimension_numbers = #tpu.dot_dimension_numbers<[1], [0], [0], [1], [0, 0, 1, 1], [], []>} : vector<64x256xf32>, vector<256x512xf32>, vector<64x512xf32> -> vector<64x512xf32>
    %c0_4 = arith.constant 0 : index
    %c0_5 = arith.constant 0 : index
    %4 = vector.load %arg4[%c0_4, %c0_5] : memref<1x512xf32, #tpu.memory_space<vmem>>, vector<1x512xf32>
    %5 = vector.broadcast %4 : vector<1x512xf32> to vector<64x512xf32>
    %6 = arith.addf %3, %5 : vector<64x512xf32>
    %7 = vector.shape_cast %6 : vector<64x512xf32> to vector<8x8x512xf32>
    %c0_6 = arith.constant 0 : index
    %c0_7 = arith.constant 0 : index
    %c0_8 = arith.constant 0 : index
    %8 = vector.load %arg10[%c0_6, %c0_7, %c0_8] : memref<8x8x512xf32, #tpu.memory_space<vmem>>, vector<8x8x512xf32>
    tpu.vector_store %arg10[%c0_6, %c0_7, %c0_8], %7 {strides = array<i32>} : memref<8x8x512xf32, #tpu.memory_space<vmem>>, vector<8x8x512xf32>,
    %c0_9 = arith.constant 0 : index
    %c0_10 = arith.constant 0 : index
    %9 = vector.load %arg3[%c0_9, %c0_10] : memref<128x512xf32, #tpu.memory_space<vmem>>, vector<128x512xf32>
    %cst_11 = arith.constant 0.000000e+00 : f32
    %10 = vector.broadcast %cst_11 : f32 to vector<8x128xf32>
    %cst_12 = arith.constant 0.000000e+00 : f32
    %11 = vector.broadcast %cst_12 : f32 to vector<8x128xf32>
    %c0_13 = arith.constant 0 : index
    %c0_14 = arith.constant 0 : index
    %c0_15 = arith.constant 0 : index
    %12 = vector.load %arg10[%c0_13, %c0_14, %c0_15] : memref<8x8x512xf32, #tpu.memory_space<vmem>>, vector<1x8x512xf32>
    %13 = vector.shape_cast %12 : vector<1x8x512xf32> to vector<8x512xf32>
    %cst_16 = arith.constant dense<0.000000e+00> : vector<8x512xf32>
    %14 = tpu.matmul %10, %9, %cst_16 {dimension_numbers = #tpu.dot_dimension_numbers<[1], [0], [0], [1], [0, 0, 1, 1], [], []>} : vector<8x128xf32>, vector<128x512xf32>, vector<8x512xf32> -> vector<8x512xf32>
    %15 = arith.addf %13, %14 : vector<8x512xf32>
    %16 = vector.extract_strided_slice %15 {offsets = [0, 0], sizes = [8, 128], strides = [1, 1]} : vector<8x512xf32> to vector<8x128xf32>
    %cst_17 = arith.constant 5.000000e-01 : f32
    %17 = vector.broadcast %cst_17 : f32 to vector<8x128xf32>
    %18 = arith.mulf %17, %16 : vector<8x128xf32>
    %19 = math.tanh %18 : vector<8x128xf32>
    %cst_18 = arith.constant 5.000000e-01 : f32
    %20 = vector.broadcast %cst_18 : f32 to vector<8x128xf32>
    %21 = arith.mulf %20, %19 : vector<8x128xf32>
    %cst_19 = arith.constant 5.000000e-01 : f32
    %22 = vector.broadcast %cst_19 : f32 to vector<8x128xf32>
    %23 = arith.addf %21, %22 : vector<8x128xf32>
    %24 = vector.extract_strided_slice %15 {offsets = [0, 128], sizes = [8, 128], strides = [1, 1]} : vector<8x512xf32> to vector<8x128xf32>
    %cst_20 = arith.constant 5.000000e-01 : f32
    %25 = vector.broadcast %cst_20 : f32 to vector<8x128xf32>
    %26 = arith.mulf %25, %24 : vector<8x128xf32>
    %27 = math.tanh %26 : vector<8x128xf32>
    %cst_21 = arith.constant 5.000000e-01 : f32
    %28 = vector.broadcast %cst_21 : f32 to vector<8x128xf32>
    %29 = arith.mulf %28, %27 : vector<8x128xf32>
    %cst_22 = arith.constant 5.000000e-01 : f32
    %30 = vector.broadcast %cst_22 : f32 to vector<8x128xf32>
    %31 = arith.addf %29, %30 : vector<8x128xf32>
    %32 = vector.extract_strided_slice %15 {offsets = [0, 256], sizes = [8, 128], strides = [1, 1]} : vector<8x512xf32> to vector<8x128xf32>
    %33 = math.tanh %32 : vector<8x128xf32>
    %34 = vector.extract_strided_slice %15 {offsets = [0, 384], sizes = [8, 128], strides = [1, 1]} : vector<8x512xf32> to vector<8x128xf32>
    %cst_23 = arith.constant 5.000000e-01 : f32
    %35 = vector.broadcast %cst_23 : f32 to vector<8x128xf32>
    %36 = arith.mulf %35, %34 : vector<8x128xf32>
    %37 = math.tanh %36 : vector<8x128xf32>
    %cst_24 = arith.constant 5.000000e-01 : f32
    %38 = vector.broadcast %cst_24 : f32 to vector<8x128xf32>
    %39 = arith.mulf %38, %37 : vector<8x128xf32>
    %cst_25 = arith.constant 5.000000e-01 : f32
    %40 = vector.broadcast %cst_25 : f32 to vector<8x128xf32>
    %41 = arith.addf %39, %40 : vector<8x128xf32>
    %42 = arith.mulf %31, %11 : vector<8x128xf32>
    %43 = arith.mulf %23, %33 : vector<8x128xf32>
    %44 = arith.addf %42, %43 : vector<8x128xf32>
    %45 = math.tanh %44 : vector<8x128xf32>
    %46 = arith.mulf %41, %45 : vector<8x128xf32>
    %c1 = arith.constant 1 : index
    %c0_26 = arith.constant 0 : index
    %c0_27 = arith.constant 0 : index
    %47 = vector.load %arg10[%c1, %c0_26, %c0_27] : memref<8x8x512xf32, #tpu.memory_space<vmem>>, vector<1x8x512xf32>
    %48 = vector.shape_cast %47 : vector<1x8x512xf32> to vector<8x512xf32>
    %cst_28 = arith.constant dense<0.000000e+00> : vector<8x512xf32>
    %49 = tpu.matmul %46, %9, %cst_28 {dimension_numbers = #tpu.dot_dimension_numbers<[1], [0], [0], [1], [0, 0, 1, 1], [], []>} : vector<8x128xf32>, vector<128x512xf32>, vector<8x512xf32> -> vector<8x512xf32>
    %50 = arith.addf %48, %49 : vector<8x512xf32>
    %51 = vector.extract_strided_slice %50 {offsets = [0, 0], sizes = [8, 128], strides = [1, 1]} : vector<8x512xf32> to vector<8x128xf32>
    %cst_29 = arith.constant 5.000000e-01 : f32
    %52 = vector.broadcast %cst_29 : f32 to vector<8x128xf32>
    %53 = arith.mulf %52, %51 : vector<8x128xf32>
    %54 = math.tanh %53 : vector<8x128xf32>
    %cst_30 = arith.constant 5.000000e-01 : f32
    %55 = vector.broadcast %cst_30 : f32 to vector<8x128xf32>
    %56 = arith.mulf %55, %54 : vector<8x128xf32>
    %cst_31 = arith.constant 5.000000e-01 : f32
    %57 = vector.broadcast %cst_31 : f32 to vector<8x128xf32>
    %58 = arith.addf %56, %57 : vector<8x128xf32>
    %59 = vector.extract_strided_slice %50 {offsets = [0, 128], sizes = [8, 128], strides = [1, 1]} : vector<8x512xf32> to vector<8x128xf32>
    %cst_32 = arith.constant 5.000000e-01 : f32
    %60 = vector.broadcast %cst_32 : f32 to vector<8x128xf32>
    %61 = arith.mulf %60, %59 : vector<8x128xf32>
    %62 = math.tanh %61 : vector<8x128xf32>
    %cst_33 = arith.constant 5.000000e-01 : f32
    %63 = vector.broadcast %cst_33 : f32 to vector<8x128xf32>
    %64 = arith.mulf %63, %62 : vector<8x128xf32>
    %cst_34 = arith.constant 5.000000e-01 : f32
    %65 = vector.broadcast %cst_34 : f32 to vector<8x128xf32>
    %66 = arith.addf %64, %65 : vector<8x128xf32>
    %67 = vector.extract_strided_slice %50 {offsets = [0, 256], sizes = [8, 128], strides = [1, 1]} : vector<8x512xf32> to vector<8x128xf32>
    %68 = math.tanh %67 : vector<8x128xf32>
    %69 = vector.extract_strided_slice %50 {offsets = [0, 384], sizes = [8, 128], strides = [1, 1]} : vector<8x512xf32> to vector<8x128xf32>
    %cst_35 = arith.constant 5.000000e-01 : f32
    %70 = vector.broadcast %cst_35 : f32 to vector<8x128xf32>
    %71 = arith.mulf %70, %69 : vector<8x128xf32>
    %72 = math.tanh %71 : vector<8x128xf32>
    %cst_36 = arith.constant 5.000000e-01 : f32
    %73 = vector.broadcast %cst_36 : f32 to vector<8x128xf32>
    %74 = arith.mulf %73, %72 : vector<8x128xf32>
    %cst_37 = arith.constant 5.000000e-01 : f32
    %75 = vector.broadcast %cst_37 : f32 to vector<8x128xf32>
    %76 = arith.addf %74, %75 : vector<8x128xf32>
    %77 = arith.mulf %66, %44 : vector<8x128xf32>
    %78 = arith.mulf %58, %68 : vector<8x128xf32>
    %79 = arith.addf %77, %78 : vector<8x128xf32>
    %80 = math.tanh %79 : vector<8x128xf32>
    %81 = arith.mulf %76, %80 : vector<8x128xf32>
    %c2 = arith.constant 2 : index
    %c0_38 = arith.constant 0 : index
    %c0_39 = arith.constant 0 : index
    %82 = vector.load %arg10[%c2, %c0_38, %c0_39] : memref<8x8x512xf32, #tpu.memory_space<vmem>>, vector<1x8x512xf32>
    %83 = vector.shape_cast %82 : vector<1x8x512xf32> to vector<8x512xf32>
    %cst_40 = arith.constant dense<0.000000e+00> : vector<8x512xf32>
    %84 = tpu.matmul %81, %9, %cst_40 {dimension_numbers = #tpu.dot_dimension_numbers<[1], [0], [0], [1], [0, 0, 1, 1], [], []>} : vector<8x128xf32>, vector<128x512xf32>, vector<8x512xf32> -> vector<8x512xf32>
    %85 = arith.addf %83, %84 : vector<8x512xf32>
    %86 = vector.extract_strided_slice %85 {offsets = [0, 0], sizes = [8, 128], strides = [1, 1]} : vector<8x512xf32> to vector<8x128xf32>
    %cst_41 = arith.constant 5.000000e-01 : f32
    %87 = vector.broadcast %cst_41 : f32 to vector<8x128xf32>
    %88 = arith.mulf %87, %86 : vector<8x128xf32>
    %89 = math.tanh %88 : vector<8x128xf32>
    %cst_42 = arith.constant 5.000000e-01 : f32
    %90 = vector.broadcast %cst_42 : f32 to vector<8x128xf32>
    %91 = arith.mulf %90, %89 : vector<8x128xf32>
    %cst_43 = arith.constant 5.000000e-01 : f32
    %92 = vector.broadcast %cst_43 : f32 to vector<8x128xf32>
    %93 = arith.addf %91, %92 : vector<8x128xf32>
    %94 = vector.extract_strided_slice %85 {offsets = [0, 128], sizes = [8, 128], strides = [1, 1]} : vector<8x512xf32> to vector<8x128xf32>
    %cst_44 = arith.constant 5.000000e-01 : f32
    %95 = vector.broadcast %cst_44 : f32 to vector<8x128xf32>
    %96 = arith.mulf %95, %94 : vector<8x128xf32>
    %97 = math.tanh %96 : vector<8x128xf32>
    %cst_45 = arith.constant 5.000000e-01 : f32
    %98 = vector.broadcast %cst_45 : f32 to vector<8x128xf32>
    %99 = arith.mulf %98, %97 : vector<8x128xf32>
    %cst_46 = arith.constant 5.000000e-01 : f32
    %100 = vector.broadcast %cst_46 : f32 to vector<8x128xf32>
    %101 = arith.addf %99, %100 : vector<8x128xf32>
    %102 = vector.extract_strided_slice %85 {offsets = [0, 256], sizes = [8, 128], strides = [1, 1]} : vector<8x512xf32> to vector<8x128xf32>
    %103 = math.tanh %102 : vector<8x128xf32>
    %104 = vector.extract_strided_slice %85 {offsets = [0, 384], sizes = [8, 128], strides = [1, 1]} : vector<8x512xf32> to vector<8x128xf32>
    %cst_47 = arith.constant 5.000000e-01 : f32
    %105 = vector.broadcast %cst_47 : f32 to vector<8x128xf32>
    %106 = arith.mulf %105, %104 : vector<8x128xf32>
    %107 = math.tanh %106 : vector<8x128xf32>
    %cst_48 = arith.constant 5.000000e-01 : f32
    %108 = vector.broadcast %cst_48 : f32 to vector<8x128xf32>
    %109 = arith.mulf %108, %107 : vector<8x128xf32>
    %cst_49 = arith.constant 5.000000e-01 : f32
    %110 = vector.broadcast %cst_49 : f32 to vector<8x128xf32>
    %111 = arith.addf %109, %110 : vector<8x128xf32>
    %112 = arith.mulf %101, %79 : vector<8x128xf32>
    %113 = arith.mulf %93, %103 : vector<8x128xf32>
    %114 = arith.addf %112, %113 : vector<8x128xf32>
    %115 = math.tanh %114 : vector<8x128xf32>
    %116 = arith.mulf %111, %115 : vector<8x128xf32>
    %c3 = arith.constant 3 : index
    %c0_50 = arith.constant 0 : index
    %c0_51 = arith.constant 0 : index
    %117 = vector.load %arg10[%c3, %c0_50, %c0_51] : memref<8x8x512xf32, #tpu.memory_space<vmem>>, vector<1x8x512xf32>
    %118 = vector.shape_cast %117 : vector<1x8x512xf32> to vector<8x512xf32>
    %cst_52 = arith.constant dense<0.000000e+00> : vector<8x512xf32>
    %119 = tpu.matmul %116, %9, %cst_52 {dimension_numbers = #tpu.dot_dimension_numbers<[1], [0], [0], [1], [0, 0, 1, 1], [], []>} : vector<8x128xf32>, vector<128x512xf32>, vector<8x512xf32> -> vector<8x512xf32>
    %120 = arith.addf %118, %119 : vector<8x512xf32>
    %121 = vector.extract_strided_slice %120 {offsets = [0, 0], sizes = [8, 128], strides = [1, 1]} : vector<8x512xf32> to vector<8x128xf32>
    %cst_53 = arith.constant 5.000000e-01 : f32
    %122 = vector.broadcast %cst_53 : f32 to vector<8x128xf32>
    %123 = arith.mulf %122, %121 : vector<8x128xf32>
    %124 = math.tanh %123 : vector<8x128xf32>
    %cst_54 = arith.constant 5.000000e-01 : f32
    %125 = vector.broadcast %cst_54 : f32 to vector<8x128xf32>
    %126 = arith.mulf %125, %124 : vector<8x128xf32>
    %cst_55 = arith.constant 5.000000e-01 : f32
    %127 = vector.broadcast %cst_55 : f32 to vector<8x128xf32>
    %128 = arith.addf %126, %127 : vector<8x128xf32>
    %129 = vector.extract_strided_slice %120 {offsets = [0, 128], sizes = [8, 128], strides = [1, 1]} : vector<8x512xf32> to vector<8x128xf32>
    %cst_56 = arith.constant 5.000000e-01 : f32
    %130 = vector.broadcast %cst_56 : f32 to vector<8x128xf32>
    %131 = arith.mulf %130, %129 : vector<8x128xf32>
    %132 = math.tanh %131 : vector<8x128xf32>
    %cst_57 = arith.constant 5.000000e-01 : f32
    %133 = vector.broadcast %cst_57 : f32 to vector<8x128xf32>
    %134 = arith.mulf %133, %132 : vector<8x128xf32>
    %cst_58 = arith.constant 5.000000e-01 : f32
    %135 = vector.broadcast %cst_58 : f32 to vector<8x128xf32>
    %136 = arith.addf %134, %135 : vector<8x128xf32>
    %137 = vector.extract_strided_slice %120 {offsets = [0, 256], sizes = [8, 128], strides = [1, 1]} : vector<8x512xf32> to vector<8x128xf32>
    %138 = math.tanh %137 : vector<8x128xf32>
    %139 = vector.extract_strided_slice %120 {offsets = [0, 384], sizes = [8, 128], strides = [1, 1]} : vector<8x512xf32> to vector<8x128xf32>
    %cst_59 = arith.constant 5.000000e-01 : f32
    %140 = vector.broadcast %cst_59 : f32 to vector<8x128xf32>
    %141 = arith.mulf %140, %139 : vector<8x128xf32>
    %142 = math.tanh %141 : vector<8x128xf32>
    %cst_60 = arith.constant 5.000000e-01 : f32
    %143 = vector.broadcast %cst_60 : f32 to vector<8x128xf32>
    %144 = arith.mulf %143, %142 : vector<8x128xf32>
    %cst_61 = arith.constant 5.000000e-01 : f32
    %145 = vector.broadcast %cst_61 : f32 to vector<8x128xf32>
    %146 = arith.addf %144, %145 : vector<8x128xf32>
    %147 = arith.mulf %136, %114 : vector<8x128xf32>
    %148 = arith.mulf %128, %138 : vector<8x128xf32>
    %149 = arith.addf %147, %148 : vector<8x128xf32>
    %150 = math.tanh %149 : vector<8x128xf32>
    %151 = arith.mulf %146, %150 : vector<8x128xf32>
    %c4 = arith.constant 4 : index
    %c0_62 = arith.constant 0 : index
    %c0_63 = arith.constant 0 : index
    %152 = vector.load %arg10[%c4, %c0_62, %c0_63] : memref<8x8x512xf32, #tpu.memory_space<vmem>>, vector<1x8x512xf32>
    %153 = vector.shape_cast %152 : vector<1x8x512xf32> to vector<8x512xf32>
    %cst_64 = arith.constant dense<0.000000e+00> : vector<8x512xf32>
    %154 = tpu.matmul %151, %9, %cst_64 {dimension_numbers = #tpu.dot_dimension_numbers<[1], [0], [0], [1], [0, 0, 1, 1], [], []>} : vector<8x128xf32>, vector<128x512xf32>, vector<8x512xf32> -> vector<8x512xf32>
    %155 = arith.addf %153, %154 : vector<8x512xf32>
    %156 = vector.extract_strided_slice %155 {offsets = [0, 0], sizes = [8, 128], strides = [1, 1]} : vector<8x512xf32> to vector<8x128xf32>
    %cst_65 = arith.constant 5.000000e-01 : f32
    %157 = vector.broadcast %cst_65 : f32 to vector<8x128xf32>
    %158 = arith.mulf %157, %156 : vector<8x128xf32>
    %159 = math.tanh %158 : vector<8x128xf32>
    %cst_66 = arith.constant 5.000000e-01 : f32
    %160 = vector.broadcast %cst_66 : f32 to vector<8x128xf32>
    %161 = arith.mulf %160, %159 : vector<8x128xf32>
    %cst_67 = arith.constant 5.000000e-01 : f32
    %162 = vector.broadcast %cst_67 : f32 to vector<8x128xf32>
    %163 = arith.addf %161, %162 : vector<8x128xf32>
    %164 = vector.extract_strided_slice %155 {offsets = [0, 128], sizes = [8, 128], strides = [1, 1]} : vector<8x512xf32> to vector<8x128xf32>
    %cst_68 = arith.constant 5.000000e-01 : f32
    %165 = vector.broadcast %cst_68 : f32 to vector<8x128xf32>
    %166 = arith.mulf %165, %164 : vector<8x128xf32>
    %167 = math.tanh %166 : vector<8x128xf32>
    %cst_69 = arith.constant 5.000000e-01 : f32
    %168 = vector.broadcast %cst_69 : f32 to vector<8x128xf32>
    %169 = arith.mulf %168, %167 : vector<8x128xf32>
    %cst_70 = arith.constant 5.000000e-01 : f32
    %170 = vector.broadcast %cst_70 : f32 to vector<8x128xf32>
    %171 = arith.addf %169, %170 : vector<8x128xf32>
    %172 = vector.extract_strided_slice %155 {offsets = [0, 256], sizes = [8, 128], strides = [1, 1]} : vector<8x512xf32> to vector<8x128xf32>
    %173 = math.tanh %172 : vector<8x128xf32>
    %174 = vector.extract_strided_slice %155 {offsets = [0, 384], sizes = [8, 128], strides = [1, 1]} : vector<8x512xf32> to vector<8x128xf32>
    %cst_71 = arith.constant 5.000000e-01 : f32
    %175 = vector.broadcast %cst_71 : f32 to vector<8x128xf32>
    %176 = arith.mulf %175, %174 : vector<8x128xf32>
    %177 = math.tanh %176 : vector<8x128xf32>
    %cst_72 = arith.constant 5.000000e-01 : f32
    %178 = vector.broadcast %cst_72 : f32 to vector<8x128xf32>
    %179 = arith.mulf %178, %177 : vector<8x128xf32>
    %cst_73 = arith.constant 5.000000e-01 : f32
    %180 = vector.broadcast %cst_73 : f32 to vector<8x128xf32>
    %181 = arith.addf %179, %180 : vector<8x128xf32>
    %182 = arith.mulf %171, %149 : vector<8x128xf32>
    %183 = arith.mulf %163, %173 : vector<8x128xf32>
    %184 = arith.addf %182, %183 : vector<8x128xf32>
    %185 = math.tanh %184 : vector<8x128xf32>
    %186 = arith.mulf %181, %185 : vector<8x128xf32>
    %c5 = arith.constant 5 : index
    %c0_74 = arith.constant 0 : index
    %c0_75 = arith.constant 0 : index
    %187 = vector.load %arg10[%c5, %c0_74, %c0_75] : memref<8x8x512xf32, #tpu.memory_space<vmem>>, vector<1x8x512xf32>
    %188 = vector.shape_cast %187 : vector<1x8x512xf32> to vector<8x512xf32>
    %cst_76 = arith.constant dense<0.000000e+00> : vector<8x512xf32>
    %189 = tpu.matmul %186, %9, %cst_76 {dimension_numbers = #tpu.dot_dimension_numbers<[1], [0], [0], [1], [0, 0, 1, 1], [], []>} : vector<8x128xf32>, vector<128x512xf32>, vector<8x512xf32> -> vector<8x512xf32>
    %190 = arith.addf %188, %189 : vector<8x512xf32>
    %191 = vector.extract_strided_slice %190 {offsets = [0, 0], sizes = [8, 128], strides = [1, 1]} : vector<8x512xf32> to vector<8x128xf32>
    %cst_77 = arith.constant 5.000000e-01 : f32
    %192 = vector.broadcast %cst_77 : f32 to vector<8x128xf32>
    %193 = arith.mulf %192, %191 : vector<8x128xf32>
    %194 = math.tanh %193 : vector<8x128xf32>
    %cst_78 = arith.constant 5.000000e-01 : f32
    %195 = vector.broadcast %cst_78 : f32 to vector<8x128xf32>
    %196 = arith.mulf %195, %194 : vector<8x128xf32>
    %cst_79 = arith.constant 5.000000e-01 : f32
    %197 = vector.broadcast %cst_79 : f32 to vector<8x128xf32>
    %198 = arith.addf %196, %197 : vector<8x128xf32>
    %199 = vector.extract_strided_slice %190 {offsets = [0, 128], sizes = [8, 128], strides = [1, 1]} : vector<8x512xf32> to vector<8x128xf32>
    %cst_80 = arith.constant 5.000000e-01 : f32
    %200 = vector.broadcast %cst_80 : f32 to vector<8x128xf32>
    %201 = arith.mulf %200, %199 : vector<8x128xf32>
    %202 = math.tanh %201 : vector<8x128xf32>
    %cst_81 = arith.constant 5.000000e-01 : f32
    %203 = vector.broadcast %cst_81 : f32 to vector<8x128xf32>
    %204 = arith.mulf %203, %202 : vector<8x128xf32>
    %cst_82 = arith.constant 5.000000e-01 : f32
    %205 = vector.broadcast %cst_82 : f32 to vector<8x128xf32>
    %206 = arith.addf %204, %205 : vector<8x128xf32>
    %207 = vector.extract_strided_slice %190 {offsets = [0, 256], sizes = [8, 128], strides = [1, 1]} : vector<8x512xf32> to vector<8x128xf32>
    %208 = math.tanh %207 : vector<8x128xf32>
    %209 = vector.extract_strided_slice %190 {offsets = [0, 384], sizes = [8, 128], strides = [1, 1]} : vector<8x512xf32> to vector<8x128xf32>
    %cst_83 = arith.constant 5.000000e-01 : f32
    %210 = vector.broadcast %cst_83 : f32 to vector<8x128xf32>
    %211 = arith.mulf %210, %209 : vector<8x128xf32>
    %212 = math.tanh %211 : vector<8x128xf32>
    %cst_84 = arith.constant 5.000000e-01 : f32
    %213 = vector.broadcast %cst_84 : f32 to vector<8x128xf32>
    %214 = arith.mulf %213, %212 : vector<8x128xf32>
    %cst_85 = arith.constant 5.000000e-01 : f32
    %215 = vector.broadcast %cst_85 : f32 to vector<8x128xf32>
    %216 = arith.addf %214, %215 : vector<8x128xf32>
    %217 = arith.mulf %206, %184 : vector<8x128xf32>
    %218 = arith.mulf %198, %208 : vector<8x128xf32>
    %219 = arith.addf %217, %218 : vector<8x128xf32>
    %220 = math.tanh %219 : vector<8x128xf32>
    %221 = arith.mulf %216, %220 : vector<8x128xf32>
    %c6 = arith.constant 6 : index
    %c0_86 = arith.constant 0 : index
    %c0_87 = arith.constant 0 : index
    %222 = vector.load %arg10[%c6, %c0_86, %c0_87] : memref<8x8x512xf32, #tpu.memory_space<vmem>>, vector<1x8x512xf32>
    %223 = vector.shape_cast %222 : vector<1x8x512xf32> to vector<8x512xf32>
    %cst_88 = arith.constant dense<0.000000e+00> : vector<8x512xf32>
    %224 = tpu.matmul %221, %9, %cst_88 {dimension_numbers = #tpu.dot_dimension_numbers<[1], [0], [0], [1], [0, 0, 1, 1], [], []>} : vector<8x128xf32>, vector<128x512xf32>, vector<8x512xf32> -> vector<8x512xf32>
    %225 = arith.addf %223, %224 : vector<8x512xf32>
    %226 = vector.extract_strided_slice %225 {offsets = [0, 0], sizes = [8, 128], strides = [1, 1]} : vector<8x512xf32> to vector<8x128xf32>
    %cst_89 = arith.constant 5.000000e-01 : f32
    %227 = vector.broadcast %cst_89 : f32 to vector<8x128xf32>
    %228 = arith.mulf %227, %226 : vector<8x128xf32>
    %229 = math.tanh %228 : vector<8x128xf32>
    %cst_90 = arith.constant 5.000000e-01 : f32
    %230 = vector.broadcast %cst_90 : f32 to vector<8x128xf32>
    %231 = arith.mulf %230, %229 : vector<8x128xf32>
    %cst_91 = arith.constant 5.000000e-01 : f32
    %232 = vector.broadcast %cst_91 : f32 to vector<8x128xf32>
    %233 = arith.addf %231, %232 : vector<8x128xf32>
    %234 = vector.extract_strided_slice %225 {offsets = [0, 128], sizes = [8, 128], strides = [1, 1]} : vector<8x512xf32> to vector<8x128xf32>
    %cst_92 = arith.constant 5.000000e-01 : f32
    %235 = vector.broadcast %cst_92 : f32 to vector<8x128xf32>
    %236 = arith.mulf %235, %234 : vector<8x128xf32>
    %237 = math.tanh %236 : vector<8x128xf32>
    %cst_93 = arith.constant 5.000000e-01 : f32
    %238 = vector.broadcast %cst_93 : f32 to vector<8x128xf32>
    %239 = arith.mulf %238, %237 : vector<8x128xf32>
    %cst_94 = arith.constant 5.000000e-01 : f32
    %240 = vector.broadcast %cst_94 : f32 to vector<8x128xf32>
    %241 = arith.addf %239, %240 : vector<8x128xf32>
    %242 = vector.extract_strided_slice %225 {offsets = [0, 256], sizes = [8, 128], strides = [1, 1]} : vector<8x512xf32> to vector<8x128xf32>
    %243 = math.tanh %242 : vector<8x128xf32>
    %244 = vector.extract_strided_slice %225 {offsets = [0, 384], sizes = [8, 128], strides = [1, 1]} : vector<8x512xf32> to vector<8x128xf32>
    %cst_95 = arith.constant 5.000000e-01 : f32
    %245 = vector.broadcast %cst_95 : f32 to vector<8x128xf32>
    %246 = arith.mulf %245, %244 : vector<8x128xf32>
    %247 = math.tanh %246 : vector<8x128xf32>
    %cst_96 = arith.constant 5.000000e-01 : f32
    %248 = vector.broadcast %cst_96 : f32 to vector<8x128xf32>
    %249 = arith.mulf %248, %247 : vector<8x128xf32>
    %cst_97 = arith.constant 5.000000e-01 : f32
    %250 = vector.broadcast %cst_97 : f32 to vector<8x128xf32>
    %251 = arith.addf %249, %250 : vector<8x128xf32>
    %252 = arith.mulf %241, %219 : vector<8x128xf32>
    %253 = arith.mulf %233, %243 : vector<8x128xf32>
    %254 = arith.addf %252, %253 : vector<8x128xf32>
    %255 = math.tanh %254 : vector<8x128xf32>
    %256 = arith.mulf %251, %255 : vector<8x128xf32>
    %c7 = arith.constant 7 : index
    %c0_98 = arith.constant 0 : index
    %c0_99 = arith.constant 0 : index
    %257 = vector.load %arg10[%c7, %c0_98, %c0_99] : memref<8x8x512xf32, #tpu.memory_space<vmem>>, vector<1x8x512xf32>
    %258 = vector.shape_cast %257 : vector<1x8x512xf32> to vector<8x512xf32>
    %cst_100 = arith.constant dense<0.000000e+00> : vector<8x512xf32>
    %259 = tpu.matmul %256, %9, %cst_100 {dimension_numbers = #tpu.dot_dimension_numbers<[1], [0], [0], [1], [0, 0, 1, 1], [], []>} : vector<8x128xf32>, vector<128x512xf32>, vector<8x512xf32> -> vector<8x512xf32>
    %260 = arith.addf %258, %259 : vector<8x512xf32>
    %261 = vector.extract_strided_slice %260 {offsets = [0, 0], sizes = [8, 128], strides = [1, 1]} : vector<8x512xf32> to vector<8x128xf32>
    %cst_101 = arith.constant 5.000000e-01 : f32
    %262 = vector.broadcast %cst_101 : f32 to vector<8x128xf32>
    %263 = arith.mulf %262, %261 : vector<8x128xf32>
    %264 = math.tanh %263 : vector<8x128xf32>
    %cst_102 = arith.constant 5.000000e-01 : f32
    %265 = vector.broadcast %cst_102 : f32 to vector<8x128xf32>
    %266 = arith.mulf %265, %264 : vector<8x128xf32>
    %cst_103 = arith.constant 5.000000e-01 : f32
    %267 = vector.broadcast %cst_103 : f32 to vector<8x128xf32>
    %268 = arith.addf %266, %267 : vector<8x128xf32>
    %269 = vector.extract_strided_slice %260 {offsets = [0, 128], sizes = [8, 128], strides = [1, 1]} : vector<8x512xf32> to vector<8x128xf32>
    %cst_104 = arith.constant 5.000000e-01 : f32
    %270 = vector.broadcast %cst_104 : f32 to vector<8x128xf32>
    %271 = arith.mulf %270, %269 : vector<8x128xf32>
    %272 = math.tanh %271 : vector<8x128xf32>
    %cst_105 = arith.constant 5.000000e-01 : f32
    %273 = vector.broadcast %cst_105 : f32 to vector<8x128xf32>
    %274 = arith.mulf %273, %272 : vector<8x128xf32>
    %cst_106 = arith.constant 5.000000e-01 : f32
    %275 = vector.broadcast %cst_106 : f32 to vector<8x128xf32>
    %276 = arith.addf %274, %275 : vector<8x128xf32>
    %277 = vector.extract_strided_slice %260 {offsets = [0, 256], sizes = [8, 128], strides = [1, 1]} : vector<8x512xf32> to vector<8x128xf32>
    %278 = math.tanh %277 : vector<8x128xf32>
    %279 = vector.extract_strided_slice %260 {offsets = [0, 384], sizes = [8, 128], strides = [1, 1]} : vector<8x512xf32> to vector<8x128xf32>
    %cst_107 = arith.constant 5.000000e-01 : f32
    %280 = vector.broadcast %cst_107 : f32 to vector<8x128xf32>
    %281 = arith.mulf %280, %279 : vector<8x128xf32>
    %282 = math.tanh %281 : vector<8x128xf32>
    %cst_108 = arith.constant 5.000000e-01 : f32
    %283 = vector.broadcast %cst_108 : f32 to vector<8x128xf32>
    %284 = arith.mulf %283, %282 : vector<8x128xf32>
    %cst_109 = arith.constant 5.000000e-01 : f32
    %285 = vector.broadcast %cst_109 : f32 to vector<8x128xf32>
    %286 = arith.addf %284, %285 : vector<8x128xf32>
    %287 = arith.mulf %276, %254 : vector<8x128xf32>
    %288 = arith.mulf %268, %278 : vector<8x128xf32>
    %289 = arith.addf %287, %288 : vector<8x128xf32>
    %290 = math.tanh %289 : vector<8x128xf32>
    %291 = arith.mulf %286, %290 : vector<8x128xf32>
    %c0_110 = arith.constant 0 : index
    %c0_111 = arith.constant 0 : index
    %292 = vector.load %arg5[%c0_110, %c0_111] : memref<128x128xf32, #tpu.memory_space<vmem>>, vector<128x128xf32>
    %cst_112 = arith.constant dense<0.000000e+00> : vector<8x128xf32>
    %293 = tpu.matmul %291, %292, %cst_112 {dimension_numbers = #tpu.dot_dimension_numbers<[1], [0], [0], [1], [0, 0, 1, 1], [], []>} : vector<8x128xf32>, vector<128x128xf32>, vector<8x128xf32> -> vector<8x128xf32>
    %c0_113 = arith.constant 0 : index
    %c0_114 = arith.constant 0 : index
    %294 = vector.load %arg6[%c0_113, %c0_114] : memref<1x128xf32, #tpu.memory_space<vmem>>, vector<1x128xf32>
    %295 = vector.broadcast %294 : vector<1x128xf32> to vector<8x128xf32>
    %296 = arith.addf %293, %295 : vector<8x128xf32>
    %cst_115 = arith.constant 0.000000e+00 : f32
    %297 = vector.broadcast %cst_115 : f32 to vector<8x128xf32>
    %298 = arith.maximumf %296, %297 : vector<8x128xf32>
    %c0_116 = arith.constant 0 : index
    %c0_117 = arith.constant 0 : index
    %299 = vector.load %arg7[%c0_116, %c0_117] : memref<128x128xf32, #tpu.memory_space<vmem>>, vector<128x128xf32>
    %cst_118 = arith.constant dense<0.000000e+00> : vector<8x128xf32>
    %300 = tpu.matmul %298, %299, %cst_118 {dimension_numbers = #tpu.dot_dimension_numbers<[1], [0], [0], [1], [0, 0, 1, 1], [], []>} : vector<8x128xf32>, vector<128x128xf32>, vector<8x128xf32> -> vector<8x128xf32>
    %c0_119 = arith.constant 0 : index
    %c0_120 = arith.constant 0 : index
    %301 = vector.load %arg8[%c0_119, %c0_120] : memref<1x128xf32, #tpu.memory_space<vmem>>, vector<1x128xf32>
    %302 = vector.broadcast %301 : vector<1x128xf32> to vector<8x128xf32>
    %303 = arith.addf %300, %302 : vector<8x128xf32>
    %cst_121 = arith.constant dense<0xFF800000> : vector<8xf32>
    %304 = vector.multi_reduction <maximumf>, %303, %cst_121 [1] : vector<8x128xf32> to vector<8xf32>
    %305 = vector.shape_cast %304 : vector<8xf32> to vector<8x1xf32>
    %306 = vector.broadcast %305 : vector<8x1xf32> to vector<8x128xf32>
    %307 = arith.subf %303, %306 : vector<8x128xf32>
    %308 = math.exp %307 : vector<8x128xf32>
    %cst_122 = arith.constant dense<0.000000e+00> : vector<8xf32>
    %309 = vector.multi_reduction <add>, %308, %cst_122 [1] : vector<8x128xf32> to vector<8xf32>
    %310 = vector.shape_cast %309 : vector<8xf32> to vector<8x1xf32>
    %311 = vector.broadcast %310 : vector<8x1xf32> to vector<8x128xf32>
    %312 = arith.divf %308, %311 : vector<8x128xf32>
    %c0_123 = arith.constant 0 : index
    %c0_124 = arith.constant 0 : index
    %313 = vector.load %arg9[%c0_123, %c0_124] : memref<8x128xf32, #tpu.memory_space<vmem>>, vector<8x128xf32>
    tpu.vector_store %arg9[%c0_123, %c0_124], %312 {strides = array<i32>} : memref<8x128xf32, #tpu.memory_space<vmem>>, vector<8x128xf32>,
    return
  }
  func.func @transform_0(%arg0: i32) -> (i32, i32, i32) {
    %c0_i32 = arith.constant 0 : i32
    %c0_i32_0 = arith.constant 0 : i32
    %c0_i32_1 = arith.constant 0 : i32
    return %c0_i32, %arg0, %c0_i32_0 : i32, i32, i32
  }
  func.func @transform_1(%arg0: i32) -> (i32, i32) {
    %c0_i32 = arith.constant 0 : i32
    %c0_i32_0 = arith.constant 0 : i32
    %c0_i32_1 = arith.constant 0 : i32
    return %c0_i32, %c0_i32_0 : i32, i32
  }
  func.func @transform_2(%arg0: i32) -> (i32, i32) {
    %c0_i32 = arith.constant 0 : i32
    %c0_i32_0 = arith.constant 0 : i32
    %c0_i32_1 = arith.constant 0 : i32
    return %c0_i32, %c0_i32_0 : i32, i32
  }
  func.func @transform_3(%arg0: i32) -> (i32, i32) {
    %c0_i32 = arith.constant 0 : i32
    %c0_i32_0 = arith.constant 0 : i32
    %c0_i32_1 = arith.constant 0 : i32
    return %c0_i32, %c0_i32_0 : i32, i32
  }
  func.func @transform_4(%arg0: i32) -> (i32, i32) {
    %c0_i32 = arith.constant 0 : i32
    %c0_i32_0 = arith.constant 0 : i32
    %c0_i32_1 = arith.constant 0 : i32
    return %c0_i32, %c0_i32_0 : i32, i32
  }
  func.func @transform_5(%arg0: i32) -> (i32, i32) {
    %c0_i32 = arith.constant 0 : i32
    %c0_i32_0 = arith.constant 0 : i32
    %c0_i32_1 = arith.constant 0 : i32
    return %c0_i32, %c0_i32_0 : i32, i32
  }
  func.func @transform_6(%arg0: i32) -> (i32, i32) {
    %c0_i32 = arith.constant 0 : i32
    %c0_i32_0 = arith.constant 0 : i32
    %c0_i32_1 = arith.constant 0 : i32
    return %c0_i32, %c0_i32_0 : i32, i32
  }
  func.func @transform_7(%arg0: i32) -> (i32, i32) {
    %c0_i32 = arith.constant 0 : i32
    %c0_i32_0 = arith.constant 0 : i32
    %c0_i32_1 = arith.constant 0 : i32
    return %c0_i32, %c0_i32_0 : i32, i32
  }
  func.func @transform_8(%arg0: i32) -> (i32, i32) {
    %c0_i32 = arith.constant 0 : i32
    %c0_i32_0 = arith.constant 0 : i32
    return %arg0, %c0_i32 : i32, i32
  }
}

</mosaic_0001>

<llo_original>
// kernel: tpu_custom_call.1
$region0: #{tpu_custom_call.1}
  #allocation0 [shape = 'u32[]', space=smem, size = 0x4, offset = 0x4, fixed_abs, tag = 'smem constant byte address 0x4 - core index']
  #allocation1 [shape = 'u32[144,128]{1,0:T(1,128)}', space=vmem, size = 0x12000, scoped, tag = 'internal scratch']
  #allocation2 [shape = 'f32[8,8,512]{2,1,0:T(8,128)}', space=vmem, size = 0x20000, scoped, tag = 'scratch operand']
  %s0 = inlined_call_operand.hbm [shape: f32[8,8,256], index: 0, kind: input, shape index: {}]
  %s1 = inlined_call_operand.hbm [shape: f32[256,512], index: 1, kind: input, shape index: {}]
  %s2 = inlined_call_operand.hbm [shape: f32[128,512], index: 2, kind: input, shape index: {}]
  %s3 = inlined_call_operand.vmem [shape: f32[1,512], index: 3, kind: input, shape index: {}]
  %s4 = inlined_call_operand.hbm [shape: f32[128,128], index: 4, kind: input, shape index: {}]
  %s5 = inlined_call_operand.vmem [shape: f32[1,128], index: 5, kind: input, shape index: {}]
  %s6 = inlined_call_operand.hbm [shape: f32[128,128], index: 6, kind: input, shape index: {}]
  %s7 = inlined_call_operand.vmem [shape: f32[1,128], index: 7, kind: input, shape index: {}]
  %s8 = inlined_call_operand.hbm [shape: f32[8,128], index: 8, kind: output, shape index: {}]
  %s9 = sld [smem:[#allocation0]]
  $region62: #{tpu_custom_call.1} parent=0
    _
  %s11 = ssub.s32 1, %s9
  %s12 = scalar_select 0, %s11, %s9
  $region1: #{tpu_custom_call.1} parent=0
    #allocation3 [shape = 'u8[65536]{0}', space=vmem, size = 0x10000, scoped, tag = 'input window, operand 0, single buffered']
    #allocation4 [shape = 's32[1]{0}', space=sflag, size = 0x4, scoped, tag = 'scoped memory for tpu_custom_call.1']
    #allocation5 [shape = 's32[1]{0}', space=sflag, size = 0x4, scoped, tag = 'scoped memory for tpu_custom_call.1']
    #allocation6 [shape = 'u8[524288]{0}', space=vmem, size = 0x80000, scoped, tag = 'input window, operand 1, single buffered']
    #allocation7 [shape = 's32[1]{0}', space=sflag, size = 0x4, scoped, tag = 'scoped memory for tpu_custom_call.1']
    #allocation8 [shape = 'u8[262144]{0}', space=vmem, size = 0x40000, scoped, tag = 'input window, operand 2, single buffered']
    #allocation9 [shape = 'u8[65536]{0}', space=vmem, size = 0x10000, scoped, tag = 'input window, operand 4, single buffered']
    #allocation10 [shape = 's32[1]{0}', space=sflag, size = 0x4, scoped, tag = 'scoped memory for tpu_custom_call.1']
    #allocation11 [shape = 'u8[65536]{0}', space=vmem, size = 0x10000, scoped, tag = 'input window, operand 6, single buffered']
    #allocation12 [shape = 'u8[4096]{0}', space=vmem, size = 0x1000, scoped, tag = 'output window, operand 0, single buffered']
    %13 = vsyncpa [#allocation4], 0
    %14 = vsyncpa [#allocation7], 0
    %15 = vsyncpa [#allocation10], 0
    %16 = vsyncpa [#allocation5], 0
    // Predicated region
    $region2: #{tpu_custom_call.1} parent=1 // pred_check
      _
    $region3: #{tpu_custom_call.1} parent=1 // pred_check_branch
      %18 = sbr.rel (0) target = $region5
    $region4: #{tpu_custom_call.1} parent=1 // pred_region
      %s20 = ssub.s32 2048, 2048
      %21 = vsyncadd [#allocation4], %s20
      %s22 = sshll.u32 [#allocation3], 4
      %s23 = int_to_ptr.vmem [resolvable:$true] %s22
      %28 = dma.hbm_to_vmem [thread:$0]  %s0, 2048, %s23, [#allocation4], 256, 256, 16
    $region5: #{tpu_custom_call.1} parent=1 // pred_fallthru
      _
    // Predicated region
    $region6: #{tpu_custom_call.1} parent=1 // pred_check
      _
    $region7: #{tpu_custom_call.1} parent=1 // pred_check_branch
      %30 = sbr.rel (0) target = $region9
    $region8: #{tpu_custom_call.1} parent=1 // pred_region
      %s32 = ssub.s32 16384, 16384
      %33 = vsyncadd [#allocation7], %s32
      %s34 = sshll.u32 [#allocation6], 4
      %s35 = int_to_ptr.vmem [resolvable:$true] %s34
      %40 = dma.hbm_to_vmem [thread:$0]  %s1, 16384, %s35, [#allocation7], 512, 512, 32
    $region9: #{tpu_custom_call.1} parent=1 // pred_fallthru
      _
    // Predicated region
    $region10: #{tpu_custom_call.1} parent=1 // pred_check
      _
    $region11: #{tpu_custom_call.1} parent=1 // pred_check_branch
      %42 = sbr.rel (0) target = $region13
    $region12: #{tpu_custom_call.1} parent=1 // pred_region
      %s44 = ssub.s32 8192, 8192
      %45 = vsyncadd [#allocation7], %s44
      %s46 = sshll.u32 [#allocation8], 4
      %s47 = int_to_ptr.vmem [resolvable:$true] %s46
      %52 = dma.hbm_to_vmem [thread:$0]  %s2, 8192, %s47, [#allocation7], 512, 512, 32
    $region13: #{tpu_custom_call.1} parent=1 // pred_fallthru
      _
    // Predicated region
    $region14: #{tpu_custom_call.1} parent=1 // pred_check
      _
    $region15: #{tpu_custom_call.1} parent=1 // pred_check_branch
      %54 = sbr.rel (0) target = $region17
    $region16: #{tpu_custom_call.1} parent=1 // pred_region
      _
    $region17: #{tpu_custom_call.1} parent=1 // pred_fallthru
      _
    // Predicated region
    $region18: #{tpu_custom_call.1} parent=1 // pred_check
      _
    $region19: #{tpu_custom_call.1} parent=1 // pred_check_branch
      %56 = sbr.rel (0) target = $region21
    $region20: #{tpu_custom_call.1} parent=1 // pred_region
      %s58 = ssub.s32 2048, 2048
      %59 = vsyncadd [#allocation10], %s58
      %s60 = sshll.u32 [#allocation9], 4
      %s61 = int_to_ptr.vmem [resolvable:$true] %s60
      %66 = dma.hbm_to_vmem [thread:$0]  %s4, 2048, %s61, [#allocation10], 128, 128, 8
    $region21: #{tpu_custom_call.1} parent=1 // pred_fallthru
      _
    // Predicated region
    $region22: #{tpu_custom_call.1} parent=1 // pred_check
      _
    $region23: #{tpu_custom_call.1} parent=1 // pred_check_branch
      %68 = sbr.rel (0) target = $region25
    $region24: #{tpu_custom_call.1} parent=1 // pred_region
      _
    $region25: #{tpu_custom_call.1} parent=1 // pred_fallthru
      _
    // Predicated region
    $region26: #{tpu_custom_call.1} parent=1 // pred_check
      _
    $region27: #{tpu_custom_call.1} parent=1 // pred_check_branch
      %70 = sbr.rel (0) target = $region29
    $region28: #{tpu_custom_call.1} parent=1 // pred_region
      %s72 = ssub.s32 2048, 2048
      %73 = vsyncadd [#allocation10], %s72
      %s74 = sshll.u32 [#allocation11], 4
      %s75 = int_to_ptr.vmem [resolvable:$true] %s74
      %80 = dma.hbm_to_vmem [thread:$0]  %s6, 2048, %s75, [#allocation10], 128, 128, 8
    $region29: #{tpu_custom_call.1} parent=1 // pred_fallthru
      _
    // Predicated region
    $region30: #{tpu_custom_call.1} parent=1 // pred_check
      _
    $region31: #{tpu_custom_call.1} parent=1 // pred_check_branch
      %82 = sbr.rel (0) target = $region33
    $region32: #{tpu_custom_call.1} parent=1 // pred_region
      _
    $region33: #{tpu_custom_call.1} parent=1 // pred_fallthru
      _
    // Predicated region
    $region34: #{tpu_custom_call.1} parent=1 // pred_check
      _
    $region35: #{tpu_custom_call.1} parent=1 // pred_check_branch
      %84 = sbr.rel (0) target = $region37
    $region36: #{tpu_custom_call.1} parent=1 // pred_region
      %85 = dma.done [#allocation4], 2048
    $region37: #{tpu_custom_call.1} parent=1 // pred_fallthru
      _
    // Predicated region
    $region38: #{tpu_custom_call.1} parent=1 // pred_check
      _
    $region39: #{tpu_custom_call.1} parent=1 // pred_check_branch
      %87 = sbr.rel (0) target = $region41
    $region40: #{tpu_custom_call.1} parent=1 // pred_region
      %88 = dma.done [#allocation7], 16384
    $region41: #{tpu_custom_call.1} parent=1 // pred_fallthru
      _
    // Predicated region
    $region42: #{tpu_custom_call.1} parent=1 // pred_check
      _
    $region43: #{tpu_custom_call.1} parent=1 // pred_check_branch
      %90 = sbr.rel (0) target = $region45
    $region44: #{tpu_custom_call.1} parent=1 // pred_region
      %91 = dma.done [#allocation7], 8192
    $region45: #{tpu_custom_call.1} parent=1 // pred_fallthru
      _
    // Predicated region
    $region46: #{tpu_custom_call.1} parent=1 // pred_check
      _
    $region47: #{tpu_custom_call.1} parent=1 // pred_check_branch
      %93 = sbr.rel (0) target = $region49
    $region48: #{tpu_custom_call.1} parent=1 // pred_region
      %94 = dma.done [#allocation10], 2048
    $region49: #{tpu_custom_call.1} parent=1 // pred_fallthru
      _
    // Predicated region
    $region50: #{tpu_custom_call.1} parent=1 // pred_check
      _
    $region51: #{tpu_custom_call.1} parent=1 // pred_check_branch
      %96 = sbr.rel (0) target = $region53
    $region52: #{tpu_custom_call.1} parent=1 // pred_region
      %97 = dma.done [#allocation10], 2048
    $region53: #{tpu_custom_call.1} parent=1 // pred_fallthru
      _
    %v98 = vld [vmem:[#allocation3] sm:$0xff]
    %v99 = vld [vmem:[#allocation3 + $0x8] sm:$0xff]
    %v100 = vld [vmem:[#allocation3 + $0x10] sm:$0xff]
    %v101 = vld [vmem:[#allocation3 + $0x18] sm:$0xff]
    %v102 = vld [vmem:[#allocation3 + $0x20] sm:$0xff]
    %v103 = vld [vmem:[#allocation3 + $0x28] sm:$0xff]
    %v104 = vld [vmem:[#allocation3 + $0x30] sm:$0xff]
    %v105 = vld [vmem:[#allocation3 + $0x38] sm:$0xff]
    %v106 = vld [vmem:[#allocation3 + $0x40] sm:$0xff]
    %v107 = vld [vmem:[#allocation3 + $0x48] sm:$0xff]
    %v108 = vld [vmem:[#allocation3 + $0x50] sm:$0xff]
    %v109 = vld [vmem:[#allocation3 + $0x58] sm:$0xff]
    %v110 = vld [vmem:[#allocation3 + $0x60] sm:$0xff]
    %v111 = vld [vmem:[#allocation3 + $0x68] sm:$0xff]
    %v112 = vld [vmem:[#allocation3 + $0x70] sm:$0xff]
    %v113 = vld [vmem:[#allocation3 + $0x78] sm:$0xff]
    %v114 = vld [vmem:[#allocation6] sm:$0xff]
    %v115 = vld [vmem:[#allocation6 + $0x8] sm:$0xff]
    %v116 = vld [vmem:[#allocation6 + $0x10] sm:$0xff]
    %v117 = vld [vmem:[#allocation6 + $0x18] sm:$0xff]
    %v118 = vld [vmem:[#allocation6 + $0x20] sm:$0xff]
    %v119 = vld [vmem:[#allocation6 + $0x28] sm:$0xff]
    %v120 = vld [vmem:[#allocation6 + $0x30] sm:$0xff]
    %v121 = vld [vmem:[#allocation6 + $0x38] sm:$0xff]
    %v122 = vld [vmem:[#allocation6 + $0x40] sm:$0xff]
    %v123 = vld [vmem:[#allocation6 + $0x48] sm:$0xff]
    %v124 = vld [vmem:[#allocation6 + $0x50] sm:$0xff]
    %v125 = vld [vmem:[#allocation6 + $0x58] sm:$0xff]
    %v126 = vld [vmem:[#allocation6 + $0x60] sm:$0xff]
    %v127 = vld [vmem:[#allocation6 + $0x68] sm:$0xff]
    %v128 = vld [vmem:[#allocation6 + $0x70] sm:$0xff]
    %v129 = vld [vmem:[#allocation6 + $0x78] sm:$0xff]
    %v130 = vld [vmem:[#allocation6 + $0x80] sm:$0xff]
    %v131 = vld [vmem:[#allocation6 + $0x88] sm:$0xff]
    %v132 = vld [vmem:[#allocation6 + $0x90] sm:$0xff]
    %v133 = vld [vmem:[#allocation6 + $0x98] sm:$0xff]
    %v134 = vld [vmem:[#allocation6 + $0xa0] sm:$0xff]
    %v135 = vld [vmem:[#allocation6 + $0xa8] sm:$0xff]
    %v136 = vld [vmem:[#allocation6 + $0xb0] sm:$0xff]
    %v137 = vld [vmem:[#allocation6 + $0xb8] sm:$0xff]
    %v138 = vld [vmem:[#allocation6 + $0xc0] sm:$0xff]
    %v139 = vld [vmem:[#allocation6 + $0xc8] sm:$0xff]
    %v140 = vld [vmem:[#allocation6 + $0xd0] sm:$0xff]
    %v141 = vld [vmem:[#allocation6 + $0xd8] sm:$0xff]
    %v142 = vld [vmem:[#allocation6 + $0xe0] sm:$0xff]
    %v143 = vld [vmem:[#allocation6 + $0xe8] sm:$0xff]
    %v144 = vld [vmem:[#allocation6 + $0xf0] sm:$0xff]
    %v145 = vld [vmem:[#allocation6 + $0xf8] sm:$0xff]
    %v146 = vld [vmem:[#allocation6 + $0x100] sm:$0xff]
    %v147 = vld [vmem:[#allocation6 + $0x108] sm:$0xff]
    %v148 = vld [vmem:[#allocation6 + $0x110] sm:$0xff]
    %v149 = vld [vmem:[#allocation6 + $0x118] sm:$0xff]
    %v150 = vld [vmem:[#allocation6 + $0x120] sm:$0xff]
    %v151 = vld [vmem:[#allocation6 + $0x128] sm:$0xff]
    %v152 = vld [vmem:[#allocation6 + $0x130] sm:$0xff]
    %v153 = vld [vmem:[#allocation6 + $0x138] sm:$0xff]
    %v154 = vld [vmem:[#allocation6 + $0x140] sm:$0xff]
    %v155 = vld [vmem:[#allocation6 + $0x148] sm:$0xff]
    %v156 = vld [vmem:[#allocation6 + $0x150] sm:$0xff]
    %v157 = vld [vmem:[#allocation6 + $0x158] sm:$0xff]
    %v158 = vld [vmem:[#allocation6 + $0x160] sm:$0xff]
    %v159 = vld [vmem:[#allocation6 + $0x168] sm:$0xff]
    %v160 = vld [vmem:[#allocation6 + $0x170] sm:$0xff]
    %v161 = vld [vmem:[#allocation6 + $0x178] sm:$0xff]
    %v162 = vld [vmem:[#allocation6 + $0x180] sm:$0xff]
    %v163 = vld [vmem:[#allocation6 + $0x188] sm:$0xff]
    %v164 = vld [vmem:[#allocation6 + $0x190] sm:$0xff]
    %v165 = vld [vmem:[#allocation6 + $0x198] sm:$0xff]
    %v166 = vld [vmem:[#allocation6 + $0x1a0] sm:$0xff]
    %v167 = vld [vmem:[#allocation6 + $0x1a8] sm:$0xff]
    %v168 = vld [vmem:[#allocation6 + $0x1b0] sm:$0xff]
    %v169 = vld [vmem:[#allocation6 + $0x1b8] sm:$0xff]
    %v170 = vld [vmem:[#allocation6 + $0x1c0] sm:$0xff]
    %v171 = vld [vmem:[#allocation6 + $0x1c8] sm:$0xff]
    %v172 = vld [vmem:[#allocation6 + $0x1d0] sm:$0xff]
    %v173 = vld [vmem:[#allocation6 + $0x1d8] sm:$0xff]
    %v174 = vld [vmem:[#allocation6 + $0x1e0] sm:$0xff]
    %v175 = vld [vmem:[#allocation6 + $0x1e8] sm:$0xff]
    %v176 = vld [vmem:[#allocation6 + $0x1f0] sm:$0xff]
    %v177 = vld [vmem:[#allocation6 + $0x1f8] sm:$0xff]
    %v178 = vld [vmem:[#allocation6 + $0x200] sm:$0xff]
    %v179 = vld [vmem:[#allocation6 + $0x208] sm:$0xff]
    %v180 = vld [vmem:[#allocation6 + $0x210] sm:$0xff]
    %v181 = vld [vmem:[#allocation6 + $0x218] sm:$0xff]
    %v182 = vld [vmem:[#allocation6 + $0x220] sm:$0xff]
    %v183 = vld [vmem:[#allocation6 + $0x228] sm:$0xff]
    %v184 = vld [vmem:[#allocation6 + $0x230] sm:$0xff]
    %v185 = vld [vmem:[#allocation6 + $0x238] sm:$0xff]
    %v186 = vld [vmem:[#allocation6 + $0x240] sm:$0xff]
    %v187 = vld [vmem:[#allocation6 + $0x248] sm:$0xff]
    %v188 = vld [vmem:[#allocation6 + $0x250] sm:$0xff]
    %v189 = vld [vmem:[#allocation6 + $0x258] sm:$0xff]
    %v190 = vld [vmem:[#allocation6 + $0x260] sm:$0xff]
    %v191 = vld [vmem:[#allocation6 + $0x268] sm:$0xff]
    %v192 = vld [vmem:[#allocation6 + $0x270] sm:$0xff]
    %v193 = vld [vmem:[#allocation6 + $0x278] sm:$0xff]
    %v194 = vld [vmem:[#allocation6 + $0x280] sm:$0xff]
    %v195 = vld [vmem:[#allocation6 + $0x288] sm:$0xff]
    %v196 = vld [vmem:[#allocation6 + $0x290] sm:$0xff]
    %v197 = vld [vmem:[#allocation6 + $0x298] sm:$0xff]
    %v198 = vld [vmem:[#allocation6 + $0x2a0] sm:$0xff]
    %v199 = vld [vmem:[#allocation6 + $0x2a8] sm:$0xff]
    %v200 = vld [vmem:[#allocation6 + $0x2b0] sm:$0xff]
    %v201 = vld [vmem:[#allocation6 + $0x2b8] sm:$0xff]
    %v202 = vld [vmem:[#allocation6 + $0x2c0] sm:$0xff]
    %v203 = vld [vmem:[#allocation6 + $0x2c8] sm:$0xff]
    %v204 = vld [vmem:[#allocation6 + $0x2d0] sm:$0xff]
    %v205 = vld [vmem:[#allocation6 + $0x2d8] sm:$0xff]
    %v206 = vld [vmem:[#allocation6 + $0x2e0] sm:$0xff]
    %v207 = vld [vmem:[#allocation6 + $0x2e8] sm:$0xff]
    %v208 = vld [vmem:[#allocation6 + $0x2f0] sm:$0xff]
    %v209 = vld [vmem:[#allocation6 + $0x2f8] sm:$0xff]
    %v210 = vld [vmem:[#allocation6 + $0x300] sm:$0xff]
    %v211 = vld [vmem:[#allocation6 + $0x308] sm:$0xff]
    %v212 = vld [vmem:[#allocation6 + $0x310] sm:$0xff]
    %v213 = vld [vmem:[#allocation6 + $0x318] sm:$0xff]
    %v214 = vld [vmem:[#allocation6 + $0x320] sm:$0xff]
    %v215 = vld [vmem:[#allocation6 + $0x328] sm:$0xff]
    %v216 = vld [vmem:[#allocation6 + $0x330] sm:$0xff]
    %v217 = vld [vmem:[#allocation6 + $0x338] sm:$0xff]
    %v218 = vld [vmem:[#allocation6 + $0x340] sm:$0xff]
    %v219 = vld [vmem:[#allocation6 + $0x348] sm:$0xff]
    %v220 = vld [vmem:[#allocation6 + $0x350] sm:$0xff]
    %v221 = vld [vmem:[#allocation6 + $0x358] sm:$0xff]
    %v222 = vld [vmem:[#allocation6 + $0x360] sm:$0xff]
    %v223 = vld [vmem:[#allocation6 + $0x368] sm:$0xff]
    %v224 = vld [vmem:[#allocation6 + $0x370] sm:$0xff]
    %v225 = vld [vmem:[#allocation6 + $0x378] sm:$0xff]
    %v226 = vld [vmem:[#allocation6 + $0x380] sm:$0xff]
    %v227 = vld [vmem:[#allocation6 + $0x388] sm:$0xff]
    %v228 = vld [vmem:[#allocation6 + $0x390] sm:$0xff]
    %v229 = vld [vmem:[#allocation6 + $0x398] sm:$0xff]
    %v230 = vld [vmem:[#allocation6 + $0x3a0] sm:$0xff]
    %v231 = vld [vmem:[#allocation6 + $0x3a8] sm:$0xff]
    %v232 = vld [vmem:[#allocation6 + $0x3b0] sm:$0xff]
    %v233 = vld [vmem:[#allocation6 + $0x3b8] sm:$0xff]
    %v234 = vld [vmem:[#allocation6 + $0x3c0] sm:$0xff]
    %v235 = vld [vmem:[#allocation6 + $0x3c8] sm:$0xff]
    %v236 = vld [vmem:[#allocation6 + $0x3d0] sm:$0xff]
    %v237 = vld [vmem:[#allocation6 + $0x3d8] sm:$0xff]
    %v238 = vld [vmem:[#allocation6 + $0x3e0] sm:$0xff]
    %v239 = vld [vmem:[#allocation6 + $0x3e8] sm:$0xff]
    %v240 = vld [vmem:[#allocation6 + $0x3f0] sm:$0xff]
    %v241 = vld [vmem:[#allocation6 + $0x3f8] sm:$0xff]
    %v242 = vld [vmem:[%s3] sm:$0xf]
    %v244 = vlaneseq
    %v245 = vshrl.u32 %v244, 7
    %v246 = vsub.s32 0, %v245
    %v247 = vrot.slane %v242, %v246
    %v248 = vlaneseq
    %v249 = vshrl.u32 %v248, 7
    %v250 = vsub.s32 1, %v249
    %v251 = vrot.slane %v242, %v250
    %v252 = vlaneseq
    %v253 = vshrl.u32 %v252, 7
    %v254 = vsub.s32 2, %v253
    %v255 = vrot.slane %v242, %v254
    %v256 = vlaneseq
    %v257 = vshrl.u32 %v256, 7
    %v258 = vsub.s32 3, %v257
    %v259 = vrot.slane %v242, %v258
    %264 = vmatprep.subr.mxu0 %v115
    %265 = vmatpush1.msra.mxu0 %v114
    %266 = vmatprep.subr.mxu0 %v119
    %267 = vmatpush1.msra.mxu0 %v118
    %268 = vmatprep.subr.mxu0 %v123
    %269 = vmatpush1.msra.mxu0 %v122
    %270 = vmatprep.subr.mxu0 %v127
    %271 = vmatpush1.msra.mxu0 %v126
    %272 = vmatprep.subr.mxu0 %v131
    %273 = vmatpush1.msra.mxu0 %v130
    %274 = vmatprep.subr.mxu0 %v135
    %275 = vmatpush1.msra.mxu0 %v134
    %276 = vmatprep.subr.mxu0 %v139
    %277 = vmatpush1.msra.mxu0 %v138
    %278 = vmatprep.subr.mxu0 %v143
    %279 = vmatpush1.msra.mxu0 %v142
    %280 = vmatprep.subr.mxu0 %v147
    %281 = vmatpush1.msra.mxu0 %v146
    %282 = vmatprep.subr.mxu0 %v151
    %283 = vmatpush1.msra.mxu0 %v150
    %284 = vmatprep.subr.mxu0 %v155
    %285 = vmatpush1.msra.mxu0 %v154
    %286 = vmatprep.subr.mxu0 %v159
    %287 = vmatpush1.msra.mxu0 %v158
    %288 = vmatprep.subr.mxu0 %v163
    %289 = vmatpush1.msra.mxu0 %v162
    %290 = vmatprep.subr.mxu0 %v167
    %291 = vmatpush1.msra.mxu0 %v166
    %292 = vmatprep.subr.mxu0 %v171
    %293 = vmatpush1.msra.mxu0 %v170
    %294 = vmatprep.subr.mxu0 %v175
    %295 = vmatpush1.msra.mxu0 %v174
    %296 = vmatprep.subr.mxu0 %v179
    %297 = vmatpush1.msra.mxu0 %v178
    %298 = vmatprep.subr.mxu0 %v183
    %299 = vmatpush1.msra.mxu0 %v182
    %300 = vmatprep.subr.mxu0 %v187
    %301 = vmatpush1.msra.mxu0 %v186
    %302 = vmatprep.subr.mxu0 %v191
    %303 = vmatpush1.msra.mxu0 %v190
    %304 = vmatprep.subr.mxu0 %v195
    %305 = vmatpush1.msra.mxu0 %v194
    %306 = vmatprep.subr.mxu0 %v199
    %307 = vmatpush1.msra.mxu0 %v198
    %308 = vmatprep.subr.mxu0 %v203
    %309 = vmatpush1.msra.mxu0 %v202
    %310 = vmatprep.subr.mxu0 %v207
    %311 = vmatpush1.msra.mxu0 %v206
    %312 = vmatprep.subr.mxu0 %v211
    %313 = vmatpush1.msra.mxu0 %v210
    %314 = vmatprep.subr.mxu0 %v215
    %315 = vmatpush1.msra.mxu0 %v214
    %316 = vmatprep.subr.mxu0 %v219
    %317 = vmatpush1.msra.mxu0 %v218
    %318 = vmatprep.subr.mxu0 %v223
    %319 = vmatpush1.msra.mxu0 %v222
    %320 = vmatprep.subr.mxu0 %v227
    %321 = vmatpush1.msra.mxu0 %v226
    %322 = vmatprep.subr.mxu0 %v231
    %323 = vmatpush1.msra.mxu0 %v230
    %324 = vmatprep.subr.mxu0 %v235
    %325 = vmatpush1.msra.mxu0 %v234
    %326 = vmatprep.subr.mxu0 %v239
    %327 = vmatpush1.msra.mxu0 %v238
    %328 = vmatprep.mubr.f32.mxu0 %v99
    %329 = vmatmul.mubr.f32.gmra.mrb[0].mxu0 %v98
    %v330 = vpop.f32.mrb[0].mxu0
    %v331 = vadd.f32 %v247, %v330
    %v332 = vpop.f32.mrb[0].mxu0
    %v333 = vadd.f32 %v251, %v332
    %334 = vmatprep.mubr.f32.mxu0 %v101
    %335 = vmatmul.mubr.f32.gmra.mrb[0].mxu0 %v100
    %v336 = vpop.f32.mrb[0].mxu0
    %v337 = vadd.f32 %v247, %v336
    %v338 = vpop.f32.mrb[0].mxu0
    %v339 = vadd.f32 %v251, %v338
    %340 = vmatprep.mubr.f32.mxu0 %v103
    %341 = vmatmul.mubr.f32.gmra.mrb[0].mxu0 %v102
    %v342 = vpop.f32.mrb[0].mxu0
    %v343 = vadd.f32 %v247, %v342
    %v344 = vpop.f32.mrb[0].mxu0
    %v345 = vadd.f32 %v251, %v344
    %346 = vmatprep.mubr.f32.mxu0 %v105
    %347 = vmatmul.mubr.f32.gmra.mrb[0].mxu0 %v104
    %v348 = vpop.f32.mrb[0].mxu0
    %v349 = vadd.f32 %v247, %v348
    %v350 = vpop.f32.mrb[0].mxu0
    %v351 = vadd.f32 %v251, %v350
    %352 = vmatprep.mubr.f32.mxu0 %v107
    %353 = vmatmul.mubr.f32.gmra.mrb[0].mxu0 %v106
    %v354 = vpop.f32.mrb[0].mxu0
    %v355 = vadd.f32 %v247, %v354
    %v356 = vpop.f32.mrb[0].mxu0
    %v357 = vadd.f32 %v251, %v356
    %358 = vmatprep.mubr.f32.mxu0 %v109
    %359 = vmatmul.mubr.f32.gmra.mrb[0].mxu0 %v108
    %v360 = vpop.f32.mrb[0].mxu0
    %v361 = vadd.f32 %v247, %v360
    %v362 = vpop.f32.mrb[0].mxu0
    %v363 = vadd.f32 %v251, %v362
    %364 = vmatprep.mubr.f32.mxu0 %v111
    %365 = vmatmul.mubr.f32.gmra.mrb[0].mxu0 %v110
    %v366 = vpop.f32.mrb[0].mxu0
    %v367 = vadd.f32 %v247, %v366
    %v368 = vpop.f32.mrb[0].mxu0
    %v369 = vadd.f32 %v251, %v368
    %370 = vmatprep.mubr.f32.mxu0 %v113
    %371 = vmatmul.mubr.f32.gmra.mrb[0].mxu0 %v112
    %v372 = vpop.f32.mrb[0].mxu0
    %v373 = vadd.f32 %v247, %v372
    %v374 = vpop.f32.mrb[0].mxu0
    %v375 = vadd.f32 %v251, %v374
    %376 = vdwg.mxu0
    %377 = vmatprep.subr.mxu0 %v117
    %378 = vmatpush1.msra.mxu0 %v116
    %379 = vmatprep.subr.mxu0 %v121
    %380 = vmatpush1.msra.mxu0 %v120
    %381 = vmatprep.subr.mxu0 %v125
    %382 = vmatpush1.msra.mxu0 %v124
    %383 = vmatprep.subr.mxu0 %v129
    %384 = vmatpush1.msra.mxu0 %v128
    %385 = vmatprep.subr.mxu0 %v133
    %386 = vmatpush1.msra.mxu0 %v132
    %387 = vmatprep.subr.mxu0 %v137
    %388 = vmatpush1.msra.mxu0 %v136
    %389 = vmatprep.subr.mxu0 %v141
    %390 = vmatpush1.msra.mxu0 %v140
    %391 = vmatprep.subr.mxu0 %v145
    %392 = vmatpush1.msra.mxu0 %v144
    %393 = vmatprep.subr.mxu0 %v149
    %394 = vmatpush1.msra.mxu0 %v148
    %395 = vmatprep.subr.mxu0 %v153
    %396 = vmatpush1.msra.mxu0 %v152
    %397 = vmatprep.subr.mxu0 %v157
    %398 = vmatpush1.msra.mxu0 %v156
    %399 = vmatprep.subr.mxu0 %v161
    %400 = vmatpush1.msra.mxu0 %v160
    %401 = vmatprep.subr.mxu0 %v165
    %402 = vmatpush1.msra.mxu0 %v164
    %403 = vmatprep.subr.mxu0 %v169
    %404 = vmatpush1.msra.mxu0 %v168
    %405 = vmatprep.subr.mxu0 %v173
    %406 = vmatpush1.msra.mxu0 %v172
    %407 = vmatprep.subr.mxu0 %v177
    %408 = vmatpush1.msra.mxu0 %v176
    %409 = vmatprep.subr.mxu0 %v181
    %410 = vmatpush1.msra.mxu0 %v180
    %411 = vmatprep.subr.mxu0 %v185
    %412 = vmatpush1.msra.mxu0 %v184
    %413 = vmatprep.subr.mxu0 %v189
    %414 = vmatpush1.msra.mxu0 %v188
    %415 = vmatprep.subr.mxu0 %v193
    %416 = vmatpush1.msra.mxu0 %v192
    %417 = vmatprep.subr.mxu0 %v197
    %418 = vmatpush1.msra.mxu0 %v196
    %419 = vmatprep.subr.mxu0 %v201
    %420 = vmatpush1.msra.mxu0 %v200
    %421 = vmatprep.subr.mxu0 %v205
    %422 = vmatpush1.msra.mxu0 %v204
    %423 = vmatprep.subr.mxu0 %v209
    %424 = vmatpush1.msra.mxu0 %v208
    %425 = vmatprep.subr.mxu0 %v213
    %426 = vmatpush1.msra.mxu0 %v212
    %427 = vmatprep.subr.mxu0 %v217
    %428 = vmatpush1.msra.mxu0 %v216
    %429 = vmatprep.subr.mxu0 %v221
    %430 = vmatpush1.msra.mxu0 %v220
    %431 = vmatprep.subr.mxu0 %v225
    %432 = vmatpush1.msra.mxu0 %v224
    %433 = vmatprep.subr.mxu0 %v229
    %434 = vmatpush1.msra.mxu0 %v228
    %435 = vmatprep.subr.mxu0 %v233
    %436 = vmatpush1.msra.mxu0 %v232
    %437 = vmatprep.subr.mxu0 %v237
    %438 = vmatpush1.msra.mxu0 %v236
    %439 = vmatprep.subr.mxu0 %v241
    %440 = vmatpush1.msra.mxu0 %v240
    %441 = vmatprep.mubr.f32.mxu0 %v99
    %442 = vmatmul.mubr.f32.gmra.mrb[0].mxu0 %v98
    %v443 = vpop.f32.mrb[0].mxu0
    %v444 = vadd.f32 %v255, %v443
    %v445 = vpop.f32.mrb[0].mxu0
    %v446 = vadd.f32 %v259, %v445
    %447 = vmatprep.mubr.f32.mxu0 %v101
    %448 = vmatmul.mubr.f32.gmra.mrb[0].mxu0 %v100
    %v449 = vpop.f32.mrb[0].mxu0
    %v450 = vadd.f32 %v255, %v449
    %v451 = vpop.f32.mrb[0].mxu0
    %v452 = vadd.f32 %v259, %v451
    %453 = vmatprep.mubr.f32.mxu0 %v103
    %454 = vmatmul.mubr.f32.gmra.mrb[0].mxu0 %v102
    %v455 = vpop.f32.mrb[0].mxu0
    %v456 = vadd.f32 %v255, %v455
    %v457 = vpop.f32.mrb[0].mxu0
    %v458 = vadd.f32 %v259, %v457
    %459 = vmatprep.mubr.f32.mxu0 %v105
    %460 = vmatmul.mubr.f32.gmra.mrb[0].mxu0 %v104
    %v461 = vpop.f32.mrb[0].mxu0
    %v462 = vadd.f32 %v255, %v461
    %v463 = vpop.f32.mrb[0].mxu0
    %v464 = vadd.f32 %v259, %v463
    %465 = vmatprep.mubr.f32.mxu0 %v107
    %466 = vmatmul.mubr.f32.gmra.mrb[0].mxu0 %v106
    %v467 = vpop.f32.mrb[0].mxu0
    %v468 = vadd.f32 %v255, %v467
    %v469 = vpop.f32.mrb[0].mxu0
    %v470 = vadd.f32 %v259, %v469
    %471 = vmatprep.mubr.f32.mxu0 %v109
    %472 = vmatmul.mubr.f32.gmra.mrb[0].mxu0 %v108
    %v473 = vpop.f32.mrb[0].mxu0
    %v474 = vadd.f32 %v255, %v473
    %v475 = vpop.f32.mrb[0].mxu0
    %v476 = vadd.f32 %v259, %v475
    %477 = vmatprep.mubr.f32.mxu0 %v111
    %478 = vmatmul.mubr.f32.gmra.mrb[0].mxu0 %v110
    %v479 = vpop.f32.mrb[0].mxu0
    %v480 = vadd.f32 %v255, %v479
    %v481 = vpop.f32.mrb[0].mxu0
    %v482 = vadd.f32 %v259, %v481
    %483 = vmatprep.mubr.f32.mxu0 %v113
    %484 = vmatmul.mubr.f32.gmra.mrb[0].mxu0 %v112
    %v485 = vpop.f32.mrb[0].mxu0
    %v486 = vadd.f32 %v255, %v485
    %v487 = vpop.f32.mrb[0].mxu0
    %v488 = vadd.f32 %v259, %v487
    %489 = vdwg.mxu0
    %490 = vst [vmem:[#allocation2] sm:$0xff] %v331
    %491 = vst [vmem:[#allocation2 + $0x8] sm:$0xff] %v333
    %492 = vst [vmem:[#allocation2 + $0x10] sm:$0xff] %v444
    %493 = vst [vmem:[#allocation2 + $0x18] sm:$0xff] %v446
    %494 = vst [vmem:[#allocation2 + $0x20] sm:$0xff] %v337
    %495 = vst [vmem:[#allocation2 + $0x28] sm:$0xff] %v339
    %496 = vst [vmem:[#allocation2 + $0x30] sm:$0xff] %v450
    %497 = vst [vmem:[#allocation2 + $0x38] sm:$0xff] %v452
    %498 = vst [vmem:[#allocation2 + $0x40] sm:$0xff] %v343
    %499 = vst [vmem:[#allocation2 + $0x48] sm:$0xff] %v345
    %500 = vst [vmem:[#allocation2 + $0x50] sm:$0xff] %v456
    %501 = vst [vmem:[#allocation2 + $0x58] sm:$0xff] %v458
    %502 = vst [vmem:[#allocation2 + $0x60] sm:$0xff] %v349
    %503 = vst [vmem:[#allocation2 + $0x68] sm:$0xff] %v351
    %504 = vst [vmem:[#allocation2 + $0x70] sm:$0xff] %v462
    %505 = vst [vmem:[#allocation2 + $0x78] sm:$0xff] %v464
    %506 = vst [vmem:[#allocation2 + $0x80] sm:$0xff] %v355
    %507 = vst [vmem:[#allocation2 + $0x88] sm:$0xff] %v357
    %508 = vst [vmem:[#allocation2 + $0x90] sm:$0xff] %v468
    %509 = vst [vmem:[#allocation2 + $0x98] sm:$0xff] %v470
    %510 = vst [vmem:[#allocation2 + $0xa0] sm:$0xff] %v361
    %511 = vst [vmem:[#allocation2 + $0xa8] sm:$0xff] %v363
    %512 = vst [vmem:[#allocation2 + $0xb0] sm:$0xff] %v474
    %513 = vst [vmem:[#allocation2 + $0xb8] sm:$0xff] %v476
    %514 = vst [vmem:[#allocation2 + $0xc0] sm:$0xff] %v367
    %515 = vst [vmem:[#allocation2 + $0xc8] sm:$0xff] %v369
    %516 = vst [vmem:[#allocation2 + $0xd0] sm:$0xff] %v480
    %517 = vst [vmem:[#allocation2 + $0xd8] sm:$0xff] %v482
    %518 = vst [vmem:[#allocation2 + $0xe0] sm:$0xff] %v373
    %519 = vst [vmem:[#allocation2 + $0xe8] sm:$0xff] %v375
    %520 = vst [vmem:[#allocation2 + $0xf0] sm:$0xff] %v486
    %521 = vst [vmem:[#allocation2 + $0xf8] sm:$0xff] %v488
    %v522 = vld [vmem:[#allocation8] sm:$0xff]
    %v523 = vld [vmem:[#allocation8 + $0x8] sm:$0xff]
    %v524 = vld [vmem:[#allocation8 + $0x10] sm:$0xff]
    %v525 = vld [vmem:[#allocation8 + $0x18] sm:$0xff]
    %v526 = vld [vmem:[#allocation8 + $0x20] sm:$0xff]
    %v527 = vld [vmem:[#allocation8 + $0x28] sm:$0xff]
    %v528 = vld [vmem:[#allocation8 + $0x30] sm:$0xff]
    %v529 = vld [vmem:[#allocation8 + $0x38] sm:$0xff]
    %v530 = vld [vmem:[#allocation8 + $0x40] sm:$0xff]
    %v531 = vld [vmem:[#allocation8 + $0x48] sm:$0xff]
    %v532 = vld [vmem:[#allocation8 + $0x50] sm:$0xff]
    %v533 = vld [vmem:[#allocation8 + $0x58] sm:$0xff]
    %v534 = vld [vmem:[#allocation8 + $0x60] sm:$0xff]
    %v535 = vld [vmem:[#allocation8 + $0x68] sm:$0xff]
    %v536 = vld [vmem:[#allocation8 + $0x70] sm:$0xff]
    %v537 = vld [vmem:[#allocation8 + $0x78] sm:$0xff]
    %v538 = vld [vmem:[#allocation8 + $0x80] sm:$0xff]
    %v539 = vld [vmem:[#allocation8 + $0x88] sm:$0xff]
    %v540 = vld [vmem:[#allocation8 + $0x90] sm:$0xff]
    %v541 = vld [vmem:[#allocation8 + $0x98] sm:$0xff]
    %v542 = vld [vmem:[#allocation8 + $0xa0] sm:$0xff]
    %v543 = vld [vmem:[#allocation8 + $0xa8] sm:$0xff]
    %v544 = vld [vmem:[#allocation8 + $0xb0] sm:$0xff]
    %v545 = vld [vmem:[#allocation8 + $0xb8] sm:$0xff]
    %v546 = vld [vmem:[#allocation8 + $0xc0] sm:$0xff]
    %v547 = vld [vmem:[#allocation8 + $0xc8] sm:$0xff]
    %v548 = vld [vmem:[#allocation8 + $0xd0] sm:$0xff]
    %v549 = vld [vmem:[#allocation8 + $0xd8] sm:$0xff]
    %v550 = vld [vmem:[#allocation8 + $0xe0] sm:$0xff]
    %v551 = vld [vmem:[#allocation8 + $0xe8] sm:$0xff]
    %v552 = vld [vmem:[#allocation8 + $0xf0] sm:$0xff]
    %v553 = vld [vmem:[#allocation8 + $0xf8] sm:$0xff]
    %v554 = vld [vmem:[#allocation8 + $0x100] sm:$0xff]
    %v555 = vld [vmem:[#allocation8 + $0x108] sm:$0xff]
    %v556 = vld [vmem:[#allocation8 + $0x110] sm:$0xff]
    %v557 = vld [vmem:[#allocation8 + $0x118] sm:$0xff]
    %v558 = vld [vmem:[#allocation8 + $0x120] sm:$0xff]
    %v559 = vld [vmem:[#allocation8 + $0x128] sm:$0xff]
    %v560 = vld [vmem:[#allocation8 + $0x130] sm:$0xff]
    %v561 = vld [vmem:[#allocation8 + $0x138] sm:$0xff]
    %v562 = vld [vmem:[#allocation8 + $0x140] sm:$0xff]
    %v563 = vld [vmem:[#allocation8 + $0x148] sm:$0xff]
    %v564 = vld [vmem:[#allocation8 + $0x150] sm:$0xff]
    %v565 = vld [vmem:[#allocation8 + $0x158] sm:$0xff]
    %v566 = vld [vmem:[#allocation8 + $0x160] sm:$0xff]
    %v567 = vld [vmem:[#allocation8 + $0x168] sm:$0xff]
    %v568 = vld [vmem:[#allocation8 + $0x170] sm:$0xff]
    %v569 = vld [vmem:[#allocation8 + $0x178] sm:$0xff]
    %v570 = vld [vmem:[#allocation8 + $0x180] sm:$0xff]
    %v571 = vld [vmem:[#allocation8 + $0x188] sm:$0xff]
    %v572 = vld [vmem:[#allocation8 + $0x190] sm:$0xff]
    %v573 = vld [vmem:[#allocation8 + $0x198] sm:$0xff]
    %v574 = vld [vmem:[#allocation8 + $0x1a0] sm:$0xff]
    %v575 = vld [vmem:[#allocation8 + $0x1a8] sm:$0xff]
    %v576 = vld [vmem:[#allocation8 + $0x1b0] sm:$0xff]
    %v577 = vld [vmem:[#allocation8 + $0x1b8] sm:$0xff]
    %v578 = vld [vmem:[#allocation8 + $0x1c0] sm:$0xff]
    %v579 = vld [vmem:[#allocation8 + $0x1c8] sm:$0xff]
    %v580 = vld [vmem:[#allocation8 + $0x1d0] sm:$0xff]
    %v581 = vld [vmem:[#allocation8 + $0x1d8] sm:$0xff]
    %v582 = vld [vmem:[#allocation8 + $0x1e0] sm:$0xff]
    %v583 = vld [vmem:[#allocation8 + $0x1e8] sm:$0xff]
    %v584 = vld [vmem:[#allocation8 + $0x1f0] sm:$0xff]
    %v585 = vld [vmem:[#allocation8 + $0x1f8] sm:$0xff]
    %v586 = vld [vmem:[#allocation2] sm:$0xff]
    %v587 = vld [vmem:[#allocation2 + $0x8] sm:$0xff]
    %v588 = vld [vmem:[#allocation2 + $0x10] sm:$0xff]
    %v589 = vld [vmem:[#allocation2 + $0x18] sm:$0xff]
    %590 = vmatprep.subr.mxu0 %v523
    %591 = vmatpush1.msra.mxu0 %v522
    %592 = vmatprep.subr.mxu0 %v527
    %593 = vmatpush1.msra.mxu0 %v526
    %594 = vmatprep.subr.mxu0 %v531
    %595 = vmatpush1.msra.mxu0 %v530
    %596 = vmatprep.subr.mxu0 %v535
    %597 = vmatpush1.msra.mxu0 %v534
    %598 = vmatprep.subr.mxu0 %v539
    %599 = vmatpush1.msra.mxu0 %v538
    %600 = vmatprep.subr.mxu0 %v543
    %601 = vmatpush1.msra.mxu0 %v542
    %602 = vmatprep.subr.mxu0 %v547
    %603 = vmatpush1.msra.mxu0 %v546
    %604 = vmatprep.subr.mxu0 %v551
    %605 = vmatpush1.msra.mxu0 %v550
    %606 = vmatprep.subr.mxu0 %v555
    %607 = vmatpush1.msra.mxu0 %v554
    %608 = vmatprep.subr.mxu0 %v559
    %609 = vmatpush1.msra.mxu0 %v558
    %610 = vmatprep.subr.mxu0 %v563
    %611 = vmatpush1.msra.mxu0 %v562
    %612 = vmatprep.subr.mxu0 %v567
    %613 = vmatpush1.msra.mxu0 %v566
    %614 = vmatprep.subr.mxu0 %v571
    %615 = vmatpush1.msra.mxu0 %v570
    %616 = vmatprep.subr.mxu0 %v575
    %617 = vmatpush1.msra.mxu0 %v574
    %618 = vmatprep.subr.mxu0 %v579
    %619 = vmatpush1.msra.mxu0 %v578
    %620 = vmatprep.subr.mxu0 %v583
    %621 = vmatpush1.msra.mxu0 %v582
    %622 = vmatprep.subr.mxu0 0.0
    %623 = vmatpush1.msra.mxu0 0.0
    %624 = vmatprep.subr.mxu0 0.0
    %625 = vmatpush1.msra.mxu0 0.0
    %626 = vmatprep.subr.mxu0 0.0
    %627 = vmatpush1.msra.mxu0 0.0
    %628 = vmatprep.subr.mxu0 0.0
    %629 = vmatpush1.msra.mxu0 0.0
    %630 = vmatprep.subr.mxu0 0.0
    %631 = vmatpush1.msra.mxu0 0.0
    %632 = vmatprep.subr.mxu0 0.0
    %633 = vmatpush1.msra.mxu0 0.0
    %634 = vmatprep.subr.mxu0 0.0
    %635 = vmatpush1.msra.mxu0 0.0
    %636 = vmatprep.subr.mxu0 0.0
    %637 = vmatpush1.msra.mxu0 0.0
    %638 = vmatprep.subr.mxu0 0.0
    %639 = vmatpush1.msra.mxu0 0.0
    %640 = vmatprep.subr.mxu0 0.0
    %641 = vmatpush1.msra.mxu0 0.0
    %642 = vmatprep.subr.mxu0 0.0
    %643 = vmatpush1.msra.mxu0 0.0
    %644 = vmatprep.subr.mxu0 0.0
    %645 = vmatpush1.msra.mxu0 0.0
    %646 = vmatprep.subr.mxu0 0.0
    %647 = vmatpush1.msra.mxu0 0.0
    %648 = vmatprep.subr.mxu0 0.0
    %649 = vmatpush1.msra.mxu0 0.0
    %650 = vmatprep.subr.mxu0 0.0
    %651 = vmatpush1.msra.mxu0 0.0
    %652 = vmatprep.subr.mxu0 0.0
    %653 = vmatpush1.msra.mxu0 0.0
    %654 = vmatprep.mubr.f32.mxu0 0.0
    %655 = vmatmul.mubr.f32.gmra.mrb[0].mxu0 0.0
    %v656 = vpop.f32.mrb[0].mxu0
    %v657 = vadd.f32 0.0, %v656
    %v658 = vpop.f32.mrb[0].mxu0
    %v659 = vadd.f32 0.0, %v658
    %660 = vdwg.mxu0
    %661 = vmatprep.subr.mxu0 %v525
    %662 = vmatpush1.msra.mxu0 %v524
    %663 = vmatprep.subr.mxu0 %v529
    %664 = vmatpush1.msra.mxu0 %v528
    %665 = vmatprep.subr.mxu0 %v533
    %666 = vmatpush1.msra.mxu0 %v532
    %667 = vmatprep.subr.mxu0 %v537
    %668 = vmatpush1.msra.mxu0 %v536
    %669 = vmatprep.subr.mxu0 %v541
    %670 = vmatpush1.msra.mxu0 %v540
    %671 = vmatprep.subr.mxu0 %v545
    %672 = vmatpush1.msra.mxu0 %v544
    %673 = vmatprep.subr.mxu0 %v549
    %674 = vmatpush1.msra.mxu0 %v548
    %675 = vmatprep.subr.mxu0 %v553
    %676 = vmatpush1.msra.mxu0 %v552
    %677 = vmatprep.subr.mxu0 %v557
    %678 = vmatpush1.msra.mxu0 %v556
    %679 = vmatprep.subr.mxu0 %v561
    %680 = vmatpush1.msra.mxu0 %v560
    %681 = vmatprep.subr.mxu0 %v565
    %682 = vmatpush1.msra.mxu0 %v564
    %683 = vmatprep.subr.mxu0 %v569
    %684 = vmatpush1.msra.mxu0 %v568
    %685 = vmatprep.subr.mxu0 %v573
    %686 = vmatpush1.msra.mxu0 %v572
    %687 = vmatprep.subr.mxu0 %v577
    %688 = vmatpush1.msra.mxu0 %v576
    %689 = vmatprep.subr.mxu0 %v581
    %690 = vmatpush1.msra.mxu0 %v580
    %691 = vmatprep.subr.mxu0 %v585
    %692 = vmatpush1.msra.mxu0 %v584
    %693 = vmatprep.subr.mxu0 0.0
    %694 = vmatpush1.msra.mxu0 0.0
    %695 = vmatprep.subr.mxu0 0.0
    %696 = vmatpush1.msra.mxu0 0.0
    %697 = vmatprep.subr.mxu0 0.0
    %698 = vmatpush1.msra.mxu0 0.0
    %699 = vmatprep.subr.mxu0 0.0
    %700 = vmatpush1.msra.mxu0 0.0
    %701 = vmatprep.subr.mxu0 0.0
    %702 = vmatpush1.msra.mxu0 0.0
    %703 = vmatprep.subr.mxu0 0.0
    %704 = vmatpush1.msra.mxu0 0.0
    %705 = vmatprep.subr.mxu0 0.0
    %706 = vmatpush1.msra.mxu0 0.0
    %707 = vmatprep.subr.mxu0 0.0
    %708 = vmatpush1.msra.mxu0 0.0
    %709 = vmatprep.subr.mxu0 0.0
    %710 = vmatpush1.msra.mxu0 0.0
    %711 = vmatprep.subr.mxu0 0.0
    %712 = vmatpush1.msra.mxu0 0.0
    %713 = vmatprep.subr.mxu0 0.0
    %714 = vmatpush1.msra.mxu0 0.0
    %715 = vmatprep.subr.mxu0 0.0
    %716 = vmatpush1.msra.mxu0 0.0
    %717 = vmatprep.subr.mxu0 0.0
    %718 = vmatpush1.msra.mxu0 0.0
    %719 = vmatprep.subr.mxu0 0.0
    %720 = vmatpush1.msra.mxu0 0.0
    %721 = vmatprep.subr.mxu0 0.0
    %722 = vmatpush1.msra.mxu0 0.0
    %723 = vmatprep.subr.mxu0 0.0
    %724 = vmatpush1.msra.mxu0 0.0
    %725 = vmatprep.mubr.f32.mxu0 0.0
    %726 = vmatmul.mubr.f32.gmra.mrb[0].mxu0 0.0
    %v727 = vpop.f32.mrb[0].mxu0
    %v728 = vadd.f32 0.0, %v727
    %v729 = vpop.f32.mrb[0].mxu0
    %v730 = vadd.f32 0.0, %v729
    %731 = vdwg.mxu0
    %v732 = vadd.f32 %v586, %v657
    %v733 = vadd.f32 %v587, %v659
    %v734 = vadd.f32 %v588, %v728
    %v735 = vadd.f32 %v589, %v730
    %v736 = vmul.f32 %v732, 0.5
    %v737 = vtanh.pop %v736
    %v738 = vmul.f32 %v737, 0.5
    %v739 = vadd.f32 %v738, 0.5
    %v740 = vmul.f32 %v733, 0.5
    %v741 = vtanh.pop %v740
    %v742 = vmul.f32 %v741, 0.5
    %v743 = vadd.f32 %v742, 0.5
    %v744 = vtanh.pop %v734
    %v745 = vmul.f32 %v735, 0.5
    %v746 = vtanh.pop %v745
    %v747 = vmul.f32 %v746, 0.5
    %v748 = vadd.f32 %v747, 0.5
    %v749 = vmul.f32 %v743, 0.0
    %v750 = vmul.f32 %v739, %v744
    %v751 = vadd.f32 %v749, %v750
    %v752 = vtanh.pop %v751
    %v753 = vmul.f32 %v748, %v752
    %s754 = scalar_lea.vmem [#allocation2], 32
    %v755 = vld [vmem:[%s754] sm:$0xff]
    %v756 = vld [vmem:[%s754 + $0x8] sm:$0xff]
    %v757 = vld [vmem:[%s754 + $0x10] sm:$0xff]
    %v758 = vld [vmem:[%s754 + $0x18] sm:$0xff]
    %759 = vmatprep.subr.mxu0 %v523
    %760 = vmatpush1.msra.mxu0 %v522
    %761 = vmatprep.subr.mxu0 %v527
    %762 = vmatpush1.msra.mxu0 %v526
    %763 = vmatprep.subr.mxu0 %v531
    %764 = vmatpush1.msra.mxu0 %v530
    %765 = vmatprep.subr.mxu0 %v535
    %766 = vmatpush1.msra.mxu0 %v534
    %767 = vmatprep.subr.mxu0 %v539
    %768 = vmatpush1.msra.mxu0 %v538
    %769 = vmatprep.subr.mxu0 %v543
    %770 = vmatpush1.msra.mxu0 %v542
    %771 = vmatprep.subr.mxu0 %v547
    %772 = vmatpush1.msra.mxu0 %v546
    %773 = vmatprep.subr.mxu0 %v551
    %774 = vmatpush1.msra.mxu0 %v550
    %775 = vmatprep.subr.mxu0 %v555
    %776 = vmatpush1.msra.mxu0 %v554
    %777 = vmatprep.subr.mxu0 %v559
    %778 = vmatpush1.msra.mxu0 %v558
    %779 = vmatprep.subr.mxu0 %v563
    %780 = vmatpush1.msra.mxu0 %v562
    %781 = vmatprep.subr.mxu0 %v567
    %782 = vmatpush1.msra.mxu0 %v566
    %783 = vmatprep.subr.mxu0 %v571
    %784 = vmatpush1.msra.mxu0 %v570
    %785 = vmatprep.subr.mxu0 %v575
    %786 = vmatpush1.msra.mxu0 %v574
    %787 = vmatprep.subr.mxu0 %v579
    %788 = vmatpush1.msra.mxu0 %v578
    %789 = vmatprep.subr.mxu0 %v583
    %790 = vmatpush1.msra.mxu0 %v582
    %791 = vmatprep.subr.mxu0 0.0
    %792 = vmatpush1.msra.mxu0 0.0
    %793 = vmatprep.subr.mxu0 0.0
    %794 = vmatpush1.msra.mxu0 0.0
    %795 = vmatprep.subr.mxu0 0.0
    %796 = vmatpush1.msra.mxu0 0.0
    %797 = vmatprep.subr.mxu0 0.0
    %798 = vmatpush1.msra.mxu0 0.0
    %799 = vmatprep.subr.mxu0 0.0
    %800 = vmatpush1.msra.mxu0 0.0
    %801 = vmatprep.subr.mxu0 0.0
    %802 = vmatpush1.msra.mxu0 0.0
    %803 = vmatprep.subr.mxu0 0.0
    %804 = vmatpush1.msra.mxu0 0.0
    %805 = vmatprep.subr.mxu0 0.0
    %806 = vmatpush1.msra.mxu0 0.0
    %807 = vmatprep.subr.mxu0 0.0
    %808 = vmatpush1.msra.mxu0 0.0
    %809 = vmatprep.subr.mxu0 0.0
    %810 = vmatpush1.msra.mxu0 0.0
    %811 = vmatprep.subr.mxu0 0.0
    %812 = vmatpush1.msra.mxu0 0.0
    %813 = vmatprep.subr.mxu0 0.0
    %814 = vmatpush1.msra.mxu0 0.0
    %815 = vmatprep.subr.mxu0 0.0
    %816 = vmatpush1.msra.mxu0 0.0
    %817 = vmatprep.subr.mxu0 0.0
    %818 = vmatpush1.msra.mxu0 0.0
    %819 = vmatprep.subr.mxu0 0.0
    %820 = vmatpush1.msra.mxu0 0.0
    %821 = vmatprep.subr.mxu0 0.0
    %822 = vmatpush1.msra.mxu0 0.0
    %823 = vmatprep.mubr.f32.mxu0 0.0
    %824 = vmatmul.mubr.f32.gmra.mrb[0].mxu0 %v753
    %v825 = vpop.f32.mrb[0].mxu0
    %v826 = vadd.f32 0.0, %v825
    %v827 = vpop.f32.mrb[0].mxu0
    %v828 = vadd.f32 0.0, %v827
    %829 = vdwg.mxu0
    %830 = vmatprep.subr.mxu0 %v525
    %831 = vmatpush1.msra.mxu0 %v524
    %832 = vmatprep.subr.mxu0 %v529
    %833 = vmatpush1.msra.mxu0 %v528
    %834 = vmatprep.subr.mxu0 %v533
    %835 = vmatpush1.msra.mxu0 %v532
    %836 = vmatprep.subr.mxu0 %v537
    %837 = vmatpush1.msra.mxu0 %v536
    %838 = vmatprep.subr.mxu0 %v541
    %839 = vmatpush1.msra.mxu0 %v540
    %840 = vmatprep.subr.mxu0 %v545
    %841 = vmatpush1.msra.mxu0 %v544
    %842 = vmatprep.subr.mxu0 %v549
    %843 = vmatpush1.msra.mxu0 %v548
    %844 = vmatprep.subr.mxu0 %v553
    %845 = vmatpush1.msra.mxu0 %v552
    %846 = vmatprep.subr.mxu0 %v557
    %847 = vmatpush1.msra.mxu0 %v556
    %848 = vmatprep.subr.mxu0 %v561
    %849 = vmatpush1.msra.mxu0 %v560
    %850 = vmatprep.subr.mxu0 %v565
    %851 = vmatpush1.msra.mxu0 %v564
    %852 = vmatprep.subr.mxu0 %v569
    %853 = vmatpush1.msra.mxu0 %v568
    %854 = vmatprep.subr.mxu0 %v573
    %855 = vmatpush1.msra.mxu0 %v572
    %856 = vmatprep.subr.mxu0 %v577
    %857 = vmatpush1.msra.mxu0 %v576
    %858 = vmatprep.subr.mxu0 %v581
    %859 = vmatpush1.msra.mxu0 %v580
    %860 = vmatprep.subr.mxu0 %v585
    %861 = vmatpush1.msra.mxu0 %v584
    %862 = vmatprep.subr.mxu0 0.0
    %863 = vmatpush1.msra.mxu0 0.0
    %864 = vmatprep.subr.mxu0 0.0
    %865 = vmatpush1.msra.mxu0 0.0
    %866 = vmatprep.subr.mxu0 0.0
    %867 = vmatpush1.msra.mxu0 0.0
    %868 = vmatprep.subr.mxu0 0.0
    %869 = vmatpush1.msra.mxu0 0.0
    %870 = vmatprep.subr.mxu0 0.0
    %871 = vmatpush1.msra.mxu0 0.0
    %872 = vmatprep.subr.mxu0 0.0
    %873 = vmatpush1.msra.mxu0 0.0
    %874 = vmatprep.subr.mxu0 0.0
    %875 = vmatpush1.msra.mxu0 0.0
    %876 = vmatprep.subr.mxu0 0.0
    %877 = vmatpush1.msra.mxu0 0.0
    %878 = vmatprep.subr.mxu0 0.0
    %879 = vmatpush1.msra.mxu0 0.0
    %880 = vmatprep.subr.mxu0 0.0
    %881 = vmatpush1.msra.mxu0 0.0
    %882 = vmatprep.subr.mxu0 0.0
    %883 = vmatpush1.msra.mxu0 0.0
    %884 = vmatprep.subr.mxu0 0.0
    %885 = vmatpush1.msra.mxu0 0.0
    %886 = vmatprep.subr.mxu0 0.0
    %887 = vmatpush1.msra.mxu0 0.0
    %888 = vmatprep.subr.mxu0 0.0
    %889 = vmatpush1.msra.mxu0 0.0
    %890 = vmatprep.subr.mxu0 0.0
    %891 = vmatpush1.msra.mxu0 0.0
    %892 = vmatprep.subr.mxu0 0.0
    %893 = vmatpush1.msra.mxu0 0.0
    %894 = vmatprep.mubr.f32.mxu0 0.0
    %895 = vmatmul.mubr.f32.gmra.mrb[0].mxu0 %v753
    %v896 = vpop.f32.mrb[0].mxu0
    %v897 = vadd.f32 0.0, %v896
    %v898 = vpop.f32.mrb[0].mxu0
    %v899 = vadd.f32 0.0, %v898
    %900 = vdwg.mxu0
    %v901 = vadd.f32 %v755, %v826
    %v902 = vadd.f32 %v756, %v828
    %v903 = vadd.f32 %v757, %v897
    %v904 = vadd.f32 %v758, %v899
    %v905 = vmul.f32 %v901, 0.5
    %v906 = vtanh.pop %v905
    %v907 = vmul.f32 %v906, 0.5
    %v908 = vadd.f32 %v907, 0.5
    %v909 = vmul.f32 %v902, 0.5
    %v910 = vtanh.pop %v909
    %v911 = vmul.f32 %v910, 0.5
    %v912 = vadd.f32 %v911, 0.5
    %v913 = vtanh.pop %v903
    %v914 = vmul.f32 %v904, 0.5
    %v915 = vtanh.pop %v914
    %v916 = vmul.f32 %v915, 0.5
    %v917 = vadd.f32 %v916, 0.5
    %v918 = vmul.f32 %v912, %v751
    %v919 = vmul.f32 %v908, %v913
    %v920 = vadd.f32 %v918, %v919
    %v921 = vtanh.pop %v920
    %v922 = vmul.f32 %v917, %v921
    %s923 = scalar_lea.vmem [#allocation2], 64
    %v924 = vld [vmem:[%s923] sm:$0xff]
    %v925 = vld [vmem:[%s923 + $0x8] sm:$0xff]
    %v926 = vld [vmem:[%s923 + $0x10] sm:$0xff]
    %v927 = vld [vmem:[%s923 + $0x18] sm:$0xff]
    %928 = vmatprep.subr.mxu0 %v523
    %929 = vmatpush1.msra.mxu0 %v522
    %930 = vmatprep.subr.mxu0 %v527
    %931 = vmatpush1.msra.mxu0 %v526
    %932 = vmatprep.subr.mxu0 %v531
    %933 = vmatpush1.msra.mxu0 %v530
    %934 = vmatprep.subr.mxu0 %v535
    %935 = vmatpush1.msra.mxu0 %v534
    %936 = vmatprep.subr.mxu0 %v539
    %937 = vmatpush1.msra.mxu0 %v538
    %938 = vmatprep.subr.mxu0 %v543
    %939 = vmatpush1.msra.mxu0 %v542
    %940 = vmatprep.subr.mxu0 %v547
    %941 = vmatpush1.msra.mxu0 %v546
    %942 = vmatprep.subr.mxu0 %v551
    %943 = vmatpush1.msra.mxu0 %v550
    %944 = vmatprep.subr.mxu0 %v555
    %945 = vmatpush1.msra.mxu0 %v554
    %946 = vmatprep.subr.mxu0 %v559
    %947 = vmatpush1.msra.mxu0 %v558
    %948 = vmatprep.subr.mxu0 %v563
    %949 = vmatpush1.msra.mxu0 %v562
    %950 = vmatprep.subr.mxu0 %v567
    %951 = vmatpush1.msra.mxu0 %v566
    %952 = vmatprep.subr.mxu0 %v571
    %953 = vmatpush1.msra.mxu0 %v570
    %954 = vmatprep.subr.mxu0 %v575
    %955 = vmatpush1.msra.mxu0 %v574
    %956 = vmatprep.subr.mxu0 %v579
    %957 = vmatpush1.msra.mxu0 %v578
    %958 = vmatprep.subr.mxu0 %v583
    %959 = vmatpush1.msra.mxu0 %v582
    %960 = vmatprep.subr.mxu0 0.0
    %961 = vmatpush1.msra.mxu0 0.0
    %962 = vmatprep.subr.mxu0 0.0
    %963 = vmatpush1.msra.mxu0 0.0
    %964 = vmatprep.subr.mxu0 0.0
    %965 = vmatpush1.msra.mxu0 0.0
    %966 = vmatprep.subr.mxu0 0.0
    %967 = vmatpush1.msra.mxu0 0.0
    %968 = vmatprep.subr.mxu0 0.0
    %969 = vmatpush1.msra.mxu0 0.0
    %970 = vmatprep.subr.mxu0 0.0
    %971 = vmatpush1.msra.mxu0 0.0
    %972 = vmatprep.subr.mxu0 0.0
    %973 = vmatpush1.msra.mxu0 0.0
    %974 = vmatprep.subr.mxu0 0.0
    %975 = vmatpush1.msra.mxu0 0.0
    %976 = vmatprep.subr.mxu0 0.0
    %977 = vmatpush1.msra.mxu0 0.0
    %978 = vmatprep.subr.mxu0 0.0
    %979 = vmatpush1.msra.mxu0 0.0
    %980 = vmatprep.subr.mxu0 0.0
    %981 = vmatpush1.msra.mxu0 0.0
    %982 = vmatprep.subr.mxu0 0.0
    %983 = vmatpush1.msra.mxu0 0.0
    %984 = vmatprep.subr.mxu0 0.0
    %985 = vmatpush1.msra.mxu0 0.0
    %986 = vmatprep.subr.mxu0 0.0
    %987 = vmatpush1.msra.mxu0 0.0
    %988 = vmatprep.subr.mxu0 0.0
    %989 = vmatpush1.msra.mxu0 0.0
    %990 = vmatprep.subr.mxu0 0.0
    %991 = vmatpush1.msra.mxu0 0.0
    %992 = vmatprep.mubr.f32.mxu0 0.0
    %993 = vmatmul.mubr.f32.gmra.mrb[0].mxu0 %v922
    %v994 = vpop.f32.mrb[0].mxu0
    %v995 = vadd.f32 0.0, %v994
    %v996 = vpop.f32.mrb[0].mxu0
    %v997 = vadd.f32 0.0, %v996
    %998 = vdwg.mxu0
    %999 = vmatprep.subr.mxu0 %v525
    %1000 = vmatpush1.msra.mxu0 %v524
    %1001 = vmatprep.subr.mxu0 %v529
    %1002 = vmatpush1.msra.mxu0 %v528
    %1003 = vmatprep.subr.mxu0 %v533
    %1004 = vmatpush1.msra.mxu0 %v532
    %1005 = vmatprep.subr.mxu0 %v537
    %1006 = vmatpush1.msra.mxu0 %v536
    %1007 = vmatprep.subr.mxu0 %v541
    %1008 = vmatpush1.msra.mxu0 %v540
    %1009 = vmatprep.subr.mxu0 %v545
    %1010 = vmatpush1.msra.mxu0 %v544
    %1011 = vmatprep.subr.mxu0 %v549
    %1012 = vmatpush1.msra.mxu0 %v548
    %1013 = vmatprep.subr.mxu0 %v553
    %1014 = vmatpush1.msra.mxu0 %v552
    %1015 = vmatprep.subr.mxu0 %v557
    %1016 = vmatpush1.msra.mxu0 %v556
    %1017 = vmatprep.subr.mxu0 %v561
    %1018 = vmatpush1.msra.mxu0 %v560
    %1019 = vmatprep.subr.mxu0 %v565
    %1020 = vmatpush1.msra.mxu0 %v564
    %1021 = vmatprep.subr.mxu0 %v569
    %1022 = vmatpush1.msra.mxu0 %v568
    %1023 = vmatprep.subr.mxu0 %v573
    %1024 = vmatpush1.msra.mxu0 %v572
    %1025 = vmatprep.subr.mxu0 %v577
    %1026 = vmatpush1.msra.mxu0 %v576
    %1027 = vmatprep.subr.mxu0 %v581
    %1028 = vmatpush1.msra.mxu0 %v580
    %1029 = vmatprep.subr.mxu0 %v585
    %1030 = vmatpush1.msra.mxu0 %v584
    %1031 = vmatprep.subr.mxu0 0.0
    %1032 = vmatpush1.msra.mxu0 0.0
    %1033 = vmatprep.subr.mxu0 0.0
    %1034 = vmatpush1.msra.mxu0 0.0
    %1035 = vmatprep.subr.mxu0 0.0
    %1036 = vmatpush1.msra.mxu0 0.0
    %1037 = vmatprep.subr.mxu0 0.0
    %1038 = vmatpush1.msra.mxu0 0.0
    %1039 = vmatprep.subr.mxu0 0.0
    %1040 = vmatpush1.msra.mxu0 0.0
    %1041 = vmatprep.subr.mxu0 0.0
    %1042 = vmatpush1.msra.mxu0 0.0
    %1043 = vmatprep.subr.mxu0 0.0
    %1044 = vmatpush1.msra.mxu0 0.0
    %1045 = vmatprep.subr.mxu0 0.0
    %1046 = vmatpush1.msra.mxu0 0.0
    %1047 = vmatprep.subr.mxu0 0.0
    %1048 = vmatpush1.msra.mxu0 0.0
    %1049 = vmatprep.subr.mxu0 0.0
    %1050 = vmatpush1.msra.mxu0 0.0
    %1051 = vmatprep.subr.mxu0 0.0
    %1052 = vmatpush1.msra.mxu0 0.0
    %1053 = vmatprep.subr.mxu0 0.0
    %1054 = vmatpush1.msra.mxu0 0.0
    %1055 = vmatprep.subr.mxu0 0.0
    %1056 = vmatpush1.msra.mxu0 0.0
    %1057 = vmatprep.subr.mxu0 0.0
    %1058 = vmatpush1.msra.mxu0 0.0
    %1059 = vmatprep.subr.mxu0 0.0
    %1060 = vmatpush1.msra.mxu0 0.0
    %1061 = vmatprep.subr.mxu0 0.0
    %1062 = vmatpush1.msra.mxu0 0.0
    %1063 = vmatprep.mubr.f32.mxu0 0.0
    %1064 = vmatmul.mubr.f32.gmra.mrb[0].mxu0 %v922
    %v1065 = vpop.f32.mrb[0].mxu0
    %v1066 = vadd.f32 0.0, %v1065
    %v1067 = vpop.f32.mrb[0].mxu0
    %v1068 = vadd.f32 0.0, %v1067
    %1069 = vdwg.mxu0
    %v1070 = vadd.f32 %v924, %v995
    %v1071 = vadd.f32 %v925, %v997
    %v1072 = vadd.f32 %v926, %v1066
    %v1073 = vadd.f32 %v927, %v1068
    %v1074 = vmul.f32 %v1070, 0.5
    %v1075 = vtanh.pop %v1074
    %v1076 = vmul.f32 %v1075, 0.5
    %v1077 = vadd.f32 %v1076, 0.5
    %v1078 = vmul.f32 %v1071, 0.5
    %v1079 = vtanh.pop %v1078
    %v1080 = vmul.f32 %v1079, 0.5
    %v1081 = vadd.f32 %v1080, 0.5
    %v1082 = vtanh.pop %v1072
    %v1083 = vmul.f32 %v1073, 0.5
    %v1084 = vtanh.pop %v1083
    %v1085 = vmul.f32 %v1084, 0.5
    %v1086 = vadd.f32 %v1085, 0.5
    %v1087 = vmul.f32 %v1081, %v920
    %v1088 = vmul.f32 %v1077, %v1082
    %v1089 = vadd.f32 %v1087, %v1088
    %v1090 = vtanh.pop %v1089
    %v1091 = vmul.f32 %v1086, %v1090
    %s1092 = scalar_lea.vmem [#allocation2], 96
    %v1093 = vld [vmem:[%s1092] sm:$0xff]
    %v1094 = vld [vmem:[%s1092 + $0x8] sm:$0xff]
    %v1095 = vld [vmem:[%s1092 + $0x10] sm:$0xff]
    %v1096 = vld [vmem:[%s1092 + $0x18] sm:$0xff]
    %1097 = vmatprep.subr.mxu0 %v523
    %1098 = vmatpush1.msra.mxu0 %v522
    %1099 = vmatprep.subr.mxu0 %v527
    %1100 = vmatpush1.msra.mxu0 %v526
    %1101 = vmatprep.subr.mxu0 %v531
    %1102 = vmatpush1.msra.mxu0 %v530
    %1103 = vmatprep.subr.mxu0 %v535
    %1104 = vmatpush1.msra.mxu0 %v534
    %1105 = vmatprep.subr.mxu0 %v539
    %1106 = vmatpush1.msra.mxu0 %v538
    %1107 = vmatprep.subr.mxu0 %v543
    %1108 = vmatpush1.msra.mxu0 %v542
    %1109 = vmatprep.subr.mxu0 %v547
    %1110 = vmatpush1.msra.mxu0 %v546
    %1111 = vmatprep.subr.mxu0 %v551
    %1112 = vmatpush1.msra.mxu0 %v550
    %1113 = vmatprep.subr.mxu0 %v555
    %1114 = vmatpush1.msra.mxu0 %v554
    %1115 = vmatprep.subr.mxu0 %v559
    %1116 = vmatpush1.msra.mxu0 %v558
    %1117 = vmatprep.subr.mxu0 %v563
    %1118 = vmatpush1.msra.mxu0 %v562
    %1119 = vmatprep.subr.mxu0 %v567
    %1120 = vmatpush1.msra.mxu0 %v566
    %1121 = vmatprep.subr.mxu0 %v571
    %1122 = vmatpush1.msra.mxu0 %v570
    %1123 = vmatprep.subr.mxu0 %v575
    %1124 = vmatpush1.msra.mxu0 %v574
    %1125 = vmatprep.subr.mxu0 %v579
    %1126 = vmatpush1.msra.mxu0 %v578
    %1127 = vmatprep.subr.mxu0 %v583
    %1128 = vmatpush1.msra.mxu0 %v582
    %1129 = vmatprep.subr.mxu0 0.0
    %1130 = vmatpush1.msra.mxu0 0.0
    %1131 = vmatprep.subr.mxu0 0.0
    %1132 = vmatpush1.msra.mxu0 0.0
    %1133 = vmatprep.subr.mxu0 0.0
    %1134 = vmatpush1.msra.mxu0 0.0
    %1135 = vmatprep.subr.mxu0 0.0
    %1136 = vmatpush1.msra.mxu0 0.0
    %1137 = vmatprep.subr.mxu0 0.0
    %1138 = vmatpush1.msra.mxu0 0.0
    %1139 = vmatprep.subr.mxu0 0.0
    %1140 = vmatpush1.msra.mxu0 0.0
    %1141 = vmatprep.subr.mxu0 0.0
    %1142 = vmatpush1.msra.mxu0 0.0
    %1143 = vmatprep.subr.mxu0 0.0
    %1144 = vmatpush1.msra.mxu0 0.0
    %1145 = vmatprep.subr.mxu0 0.0
    %1146 = vmatpush1.msra.mxu0 0.0
    %1147 = vmatprep.subr.mxu0 0.0
    %1148 = vmatpush1.msra.mxu0 0.0
    %1149 = vmatprep.subr.mxu0 0.0
    %1150 = vmatpush1.msra.mxu0 0.0
    %1151 = vmatprep.subr.mxu0 0.0
    %1152 = vmatpush1.msra.mxu0 0.0
    %1153 = vmatprep.subr.mxu0 0.0
    %1154 = vmatpush1.msra.mxu0 0.0
    %1155 = vmatprep.subr.mxu0 0.0
    %1156 = vmatpush1.msra.mxu0 0.0
    %1157 = vmatprep.subr.mxu0 0.0
    %1158 = vmatpush1.msra.mxu0 0.0
    %1159 = vmatprep.subr.mxu0 0.0
    %1160 = vmatpush1.msra.mxu0 0.0
    %1161 = vmatprep.mubr.f32.mxu0 0.0
    %1162 = vmatmul.mubr.f32.gmra.mrb[0].mxu0 %v1091
    %v1163 = vpop.f32.mrb[0].mxu0
    %v1164 = vadd.f32 0.0, %v1163
    %v1165 = vpop.f32.mrb[0].mxu0
    %v1166 = vadd.f32 0.0, %v1165
    %1167 = vdwg.mxu0
    %1168 = vmatprep.subr.mxu0 %v525
    %1169 = vmatpush1.msra.mxu0 %v524
    %1170 = vmatprep.subr.mxu0 %v529
    %1171 = vmatpush1.msra.mxu0 %v528
    %1172 = vmatprep.subr.mxu0 %v533
    %1173 = vmatpush1.msra.mxu0 %v532
    %1174 = vmatprep.subr.mxu0 %v537
    %1175 = vmatpush1.msra.mxu0 %v536
    %1176 = vmatprep.subr.mxu0 %v541
    %1177 = vmatpush1.msra.mxu0 %v540
    %1178 = vmatprep.subr.mxu0 %v545
    %1179 = vmatpush1.msra.mxu0 %v544
    %1180 = vmatprep.subr.mxu0 %v549
    %1181 = vmatpush1.msra.mxu0 %v548
    %1182 = vmatprep.subr.mxu0 %v553
    %1183 = vmatpush1.msra.mxu0 %v552
    %1184 = vmatprep.subr.mxu0 %v557
    %1185 = vmatpush1.msra.mxu0 %v556
    %1186 = vmatprep.subr.mxu0 %v561
    %1187 = vmatpush1.msra.mxu0 %v560
    %1188 = vmatprep.subr.mxu0 %v565
    %1189 = vmatpush1.msra.mxu0 %v564
    %1190 = vmatprep.subr.mxu0 %v569
    %1191 = vmatpush1.msra.mxu0 %v568
    %1192 = vmatprep.subr.mxu0 %v573
    %1193 = vmatpush1.msra.mxu0 %v572
    %1194 = vmatprep.subr.mxu0 %v577
    %1195 = vmatpush1.msra.mxu0 %v576
    %1196 = vmatprep.subr.mxu0 %v581
    %1197 = vmatpush1.msra.mxu0 %v580
    %1198 = vmatprep.subr.mxu0 %v585
    %1199 = vmatpush1.msra.mxu0 %v584
    %1200 = vmatprep.subr.mxu0 0.0
    %1201 = vmatpush1.msra.mxu0 0.0
    %1202 = vmatprep.subr.mxu0 0.0
    %1203 = vmatpush1.msra.mxu0 0.0
    %1204 = vmatprep.subr.mxu0 0.0
    %1205 = vmatpush1.msra.mxu0 0.0
    %1206 = vmatprep.subr.mxu0 0.0
    %1207 = vmatpush1.msra.mxu0 0.0
    %1208 = vmatprep.subr.mxu0 0.0
    %1209 = vmatpush1.msra.mxu0 0.0
    %1210 = vmatprep.subr.mxu0 0.0
    %1211 = vmatpush1.msra.mxu0 0.0
    %1212 = vmatprep.subr.mxu0 0.0
    %1213 = vmatpush1.msra.mxu0 0.0
    %1214 = vmatprep.subr.mxu0 0.0
    %1215 = vmatpush1.msra.mxu0 0.0
    %1216 = vmatprep.subr.mxu0 0.0
    %1217 = vmatpush1.msra.mxu0 0.0
    %1218 = vmatprep.subr.mxu0 0.0
    %1219 = vmatpush1.msra.mxu0 0.0
    %1220 = vmatprep.subr.mxu0 0.0
    %1221 = vmatpush1.msra.mxu0 0.0
    %1222 = vmatprep.subr.mxu0 0.0
    %1223 = vmatpush1.msra.mxu0 0.0
    %1224 = vmatprep.subr.mxu0 0.0
    %1225 = vmatpush1.msra.mxu0 0.0
    %1226 = vmatprep.subr.mxu0 0.0
    %1227 = vmatpush1.msra.mxu0 0.0
    %1228 = vmatprep.subr.mxu0 0.0
    %1229 = vmatpush1.msra.mxu0 0.0
    %1230 = vmatprep.subr.mxu0 0.0
    %1231 = vmatpush1.msra.mxu0 0.0
    %1232 = vmatprep.mubr.f32.mxu0 0.0
    %1233 = vmatmul.mubr.f32.gmra.mrb[0].mxu0 %v1091
    %v1234 = vpop.f32.mrb[0].mxu0
    %v1235 = vadd.f32 0.0, %v1234
    %v1236 = vpop.f32.mrb[0].mxu0
    %v1237 = vadd.f32 0.0, %v1236
    %1238 = vdwg.mxu0
    %v1239 = vadd.f32 %v1093, %v1164
    %v1240 = vadd.f32 %v1094, %v1166
    %v1241 = vadd.f32 %v1095, %v1235
    %v1242 = vadd.f32 %v1096, %v1237
    %v1243 = vmul.f32 %v1239, 0.5
    %v1244 = vtanh.pop %v1243
    %v1245 = vmul.f32 %v1244, 0.5
    %v1246 = vadd.f32 %v1245, 0.5
    %v1247 = vmul.f32 %v1240, 0.5
    %v1248 = vtanh.pop %v1247
    %v1249 = vmul.f32 %v1248, 0.5
    %v1250 = vadd.f32 %v1249, 0.5
    %v1251 = vtanh.pop %v1241
    %v1252 = vmul.f32 %v1242, 0.5
    %v1253 = vtanh.pop %v1252
    %v1254 = vmul.f32 %v1253, 0.5
    %v1255 = vadd.f32 %v1254, 0.5
    %v1256 = vmul.f32 %v1250, %v1089
    %v1257 = vmul.f32 %v1246, %v1251
    %v1258 = vadd.f32 %v1256, %v1257
    %v1259 = vtanh.pop %v1258
    %v1260 = vmul.f32 %v1255, %v1259
    %s1261 = scalar_lea.vmem [#allocation2], 128
    %v1262 = vld [vmem:[%s1261] sm:$0xff]
    %v1263 = vld [vmem:[%s1261 + $0x8] sm:$0xff]
    %v1264 = vld [vmem:[%s1261 + $0x10] sm:$0xff]
    %v1265 = vld [vmem:[%s1261 + $0x18] sm:$0xff]
    %1266 = vmatprep.subr.mxu0 %v523
    %1267 = vmatpush1.msra.mxu0 %v522
    %1268 = vmatprep.subr.mxu0 %v527
    %1269 = vmatpush1.msra.mxu0 %v526
    %1270 = vmatprep.subr.mxu0 %v531
    %1271 = vmatpush1.msra.mxu0 %v530
    %1272 = vmatprep.subr.mxu0 %v535
    %1273 = vmatpush1.msra.mxu0 %v534
    %1274 = vmatprep.subr.mxu0 %v539
    %1275 = vmatpush1.msra.mxu0 %v538
    %1276 = vmatprep.subr.mxu0 %v543
    %1277 = vmatpush1.msra.mxu0 %v542
    %1278 = vmatprep.subr.mxu0 %v547
    %1279 = vmatpush1.msra.mxu0 %v546
    %1280 = vmatprep.subr.mxu0 %v551
    %1281 = vmatpush1.msra.mxu0 %v550
    %1282 = vmatprep.subr.mxu0 %v555
    %1283 = vmatpush1.msra.mxu0 %v554
    %1284 = vmatprep.subr.mxu0 %v559
    %1285 = vmatpush1.msra.mxu0 %v558
    %1286 = vmatprep.subr.mxu0 %v563
    %1287 = vmatpush1.msra.mxu0 %v562
    %1288 = vmatprep.subr.mxu0 %v567
    %1289 = vmatpush1.msra.mxu0 %v566
    %1290 = vmatprep.subr.mxu0 %v571
    %1291 = vmatpush1.msra.mxu0 %v570
    %1292 = vmatprep.subr.mxu0 %v575
    %1293 = vmatpush1.msra.mxu0 %v574
    %1294 = vmatprep.subr.mxu0 %v579
    %1295 = vmatpush1.msra.mxu0 %v578
    %1296 = vmatprep.subr.mxu0 %v583
    %1297 = vmatpush1.msra.mxu0 %v582
    %1298 = vmatprep.subr.mxu0 0.0
    %1299 = vmatpush1.msra.mxu0 0.0
    %1300 = vmatprep.subr.mxu0 0.0
    %1301 = vmatpush1.msra.mxu0 0.0
    %1302 = vmatprep.subr.mxu0 0.0
    %1303 = vmatpush1.msra.mxu0 0.0
    %1304 = vmatprep.subr.mxu0 0.0
    %1305 = vmatpush1.msra.mxu0 0.0
    %1306 = vmatprep.subr.mxu0 0.0
    %1307 = vmatpush1.msra.mxu0 0.0
    %1308 = vmatprep.subr.mxu0 0.0
    %1309 = vmatpush1.msra.mxu0 0.0
    %1310 = vmatprep.subr.mxu0 0.0
    %1311 = vmatpush1.msra.mxu0 0.0
    %1312 = vmatprep.subr.mxu0 0.0
    %1313 = vmatpush1.msra.mxu0 0.0
    %1314 = vmatprep.subr.mxu0 0.0
    %1315 = vmatpush1.msra.mxu0 0.0
    %1316 = vmatprep.subr.mxu0 0.0
    %1317 = vmatpush1.msra.mxu0 0.0
    %1318 = vmatprep.subr.mxu0 0.0
    %1319 = vmatpush1.msra.mxu0 0.0
    %1320 = vmatprep.subr.mxu0 0.0
    %1321 = vmatpush1.msra.mxu0 0.0
    %1322 = vmatprep.subr.mxu0 0.0
    %1323 = vmatpush1.msra.mxu0 0.0
    %1324 = vmatprep.subr.mxu0 0.0
    %1325 = vmatpush1.msra.mxu0 0.0
    %1326 = vmatprep.subr.mxu0 0.0
    %1327 = vmatpush1.msra.mxu0 0.0
    %1328 = vmatprep.subr.mxu0 0.0
    %1329 = vmatpush1.msra.mxu0 0.0
    %1330 = vmatprep.mubr.f32.mxu0 0.0
    %1331 = vmatmul.mubr.f32.gmra.mrb[0].mxu0 %v1260
    %v1332 = vpop.f32.mrb[0].mxu0
    %v1333 = vadd.f32 0.0, %v1332
    %v1334 = vpop.f32.mrb[0].mxu0
    %v1335 = vadd.f32 0.0, %v1334
    %1336 = vdwg.mxu0
    %1337 = vmatprep.subr.mxu0 %v525
    %1338 = vmatpush1.msra.mxu0 %v524
    %1339 = vmatprep.subr.mxu0 %v529
    %1340 = vmatpush1.msra.mxu0 %v528
    %1341 = vmatprep.subr.mxu0 %v533
    %1342 = vmatpush1.msra.mxu0 %v532
    %1343 = vmatprep.subr.mxu0 %v537
    %1344 = vmatpush1.msra.mxu0 %v536
    %1345 = vmatprep.subr.mxu0 %v541
    %1346 = vmatpush1.msra.mxu0 %v540
    %1347 = vmatprep.subr.mxu0 %v545
    %1348 = vmatpush1.msra.mxu0 %v544
    %1349 = vmatprep.subr.mxu0 %v549
    %1350 = vmatpush1.msra.mxu0 %v548
    %1351 = vmatprep.subr.mxu0 %v553
    %1352 = vmatpush1.msra.mxu0 %v552
    %1353 = vmatprep.subr.mxu0 %v557
    %1354 = vmatpush1.msra.mxu0 %v556
    %1355 = vmatprep.subr.mxu0 %v561
    %1356 = vmatpush1.msra.mxu0 %v560
    %1357 = vmatprep.subr.mxu0 %v565
    %1358 = vmatpush1.msra.mxu0 %v564
    %1359 = vmatprep.subr.mxu0 %v569
    %1360 = vmatpush1.msra.mxu0 %v568
    %1361 = vmatprep.subr.mxu0 %v573
    %1362 = vmatpush1.msra.mxu0 %v572
    %1363 = vmatprep.subr.mxu0 %v577
    %1364 = vmatpush1.msra.mxu0 %v576
    %1365 = vmatprep.subr.mxu0 %v581
    %1366 = vmatpush1.msra.mxu0 %v580
    %1367 = vmatprep.subr.mxu0 %v585
    %1368 = vmatpush1.msra.mxu0 %v584
    %1369 = vmatprep.subr.mxu0 0.0
    %1370 = vmatpush1.msra.mxu0 0.0
    %1371 = vmatprep.subr.mxu0 0.0
    %1372 = vmatpush1.msra.mxu0 0.0
    %1373 = vmatprep.subr.mxu0 0.0
    %1374 = vmatpush1.msra.mxu0 0.0
    %1375 = vmatprep.subr.mxu0 0.0
    %1376 = vmatpush1.msra.mxu0 0.0
    %1377 = vmatprep.subr.mxu0 0.0
    %1378 = vmatpush1.msra.mxu0 0.0
    %1379 = vmatprep.subr.mxu0 0.0
    %1380 = vmatpush1.msra.mxu0 0.0
    %1381 = vmatprep.subr.mxu0 0.0
    %1382 = vmatpush1.msra.mxu0 0.0
    %1383 = vmatprep.subr.mxu0 0.0
    %1384 = vmatpush1.msra.mxu0 0.0
    %1385 = vmatprep.subr.mxu0 0.0
    %1386 = vmatpush1.msra.mxu0 0.0
    %1387 = vmatprep.subr.mxu0 0.0
    %1388 = vmatpush1.msra.mxu0 0.0
    %1389 = vmatprep.subr.mxu0 0.0
    %1390 = vmatpush1.msra.mxu0 0.0
    %1391 = vmatprep.subr.mxu0 0.0
    %1392 = vmatpush1.msra.mxu0 0.0
    %1393 = vmatprep.subr.mxu0 0.0
    %1394 = vmatpush1.msra.mxu0 0.0
    %1395 = vmatprep.subr.mxu0 0.0
    %1396 = vmatpush1.msra.mxu0 0.0
    %1397 = vmatprep.subr.mxu0 0.0
    %1398 = vmatpush1.msra.mxu0 0.0
    %1399 = vmatprep.subr.mxu0 0.0
    %1400 = vmatpush1.msra.mxu0 0.0
    %1401 = vmatprep.mubr.f32.mxu0 0.0
    %1402 = vmatmul.mubr.f32.gmra.mrb[0].mxu0 %v1260
    %v1403 = vpop.f32.mrb[0].mxu0
    %v1404 = vadd.f32 0.0, %v1403
    %v1405 = vpop.f32.mrb[0].mxu0
    %v1406 = vadd.f32 0.0, %v1405
    %1407 = vdwg.mxu0
    %v1408 = vadd.f32 %v1262, %v1333
    %v1409 = vadd.f32 %v1263, %v1335
    %v1410 = vadd.f32 %v1264, %v1404
    %v1411 = vadd.f32 %v1265, %v1406
    %v1412 = vmul.f32 %v1408, 0.5
    %v1413 = vtanh.pop %v1412
    %v1414 = vmul.f32 %v1413, 0.5
    %v1415 = vadd.f32 %v1414, 0.5
    %v1416 = vmul.f32 %v1409, 0.5
    %v1417 = vtanh.pop %v1416
    %v1418 = vmul.f32 %v1417, 0.5
    %v1419 = vadd.f32 %v1418, 0.5
    %v1420 = vtanh.pop %v1410
    %v1421 = vmul.f32 %v1411, 0.5
    %v1422 = vtanh.pop %v1421
    %v1423 = vmul.f32 %v1422, 0.5
    %v1424 = vadd.f32 %v1423, 0.5
    %v1425 = vmul.f32 %v1419, %v1258
    %v1426 = vmul.f32 %v1415, %v1420
    %v1427 = vadd.f32 %v1425, %v1426
    %v1428 = vtanh.pop %v1427
    %v1429 = vmul.f32 %v1424, %v1428
    %s1430 = scalar_lea.vmem [#allocation2], 160
    %v1431 = vld [vmem:[%s1430] sm:$0xff]
    %v1432 = vld [vmem:[%s1430 + $0x8] sm:$0xff]
    %v1433 = vld [vmem:[%s1430 + $0x10] sm:$0xff]
    %v1434 = vld [vmem:[%s1430 + $0x18] sm:$0xff]
    %1435 = vmatprep.subr.mxu0 %v523
    %1436 = vmatpush1.msra.mxu0 %v522
    %1437 = vmatprep.subr.mxu0 %v527
    %1438 = vmatpush1.msra.mxu0 %v526
    %1439 = vmatprep.subr.mxu0 %v531
    %1440 = vmatpush1.msra.mxu0 %v530
    %1441 = vmatprep.subr.mxu0 %v535
    %1442 = vmatpush1.msra.mxu0 %v534
    %1443 = vmatprep.subr.mxu0 %v539
    %1444 = vmatpush1.msra.mxu0 %v538
    %1445 = vmatprep.subr.mxu0 %v543
    %1446 = vmatpush1.msra.mxu0 %v542
    %1447 = vmatprep.subr.mxu0 %v547
    %1448 = vmatpush1.msra.mxu0 %v546
    %1449 = vmatprep.subr.mxu0 %v551
    %1450 = vmatpush1.msra.mxu0 %v550
    %1451 = vmatprep.subr.mxu0 %v555
    %1452 = vmatpush1.msra.mxu0 %v554
    %1453 = vmatprep.subr.mxu0 %v559
    %1454 = vmatpush1.msra.mxu0 %v558
    %1455 = vmatprep.subr.mxu0 %v563
    %1456 = vmatpush1.msra.mxu0 %v562
    %1457 = vmatprep.subr.mxu0 %v567
    %1458 = vmatpush1.msra.mxu0 %v566
    %1459 = vmatprep.subr.mxu0 %v571
    %1460 = vmatpush1.msra.mxu0 %v570
    %1461 = vmatprep.subr.mxu0 %v575
    %1462 = vmatpush1.msra.mxu0 %v574
    %1463 = vmatprep.subr.mxu0 %v579
    %1464 = vmatpush1.msra.mxu0 %v578
    %1465 = vmatprep.subr.mxu0 %v583
    %1466 = vmatpush1.msra.mxu0 %v582
    %1467 = vmatprep.subr.mxu0 0.0
    %1468 = vmatpush1.msra.mxu0 0.0
    %1469 = vmatprep.subr.mxu0 0.0
    %1470 = vmatpush1.msra.mxu0 0.0
    %1471 = vmatprep.subr.mxu0 0.0
    %1472 = vmatpush1.msra.mxu0 0.0
    %1473 = vmatprep.subr.mxu0 0.0
    %1474 = vmatpush1.msra.mxu0 0.0
    %1475 = vmatprep.subr.mxu0 0.0
    %1476 = vmatpush1.msra.mxu0 0.0
    %1477 = vmatprep.subr.mxu0 0.0
    %1478 = vmatpush1.msra.mxu0 0.0
    %1479 = vmatprep.subr.mxu0 0.0
    %1480 = vmatpush1.msra.mxu0 0.0
    %1481 = vmatprep.subr.mxu0 0.0
    %1482 = vmatpush1.msra.mxu0 0.0
    %1483 = vmatprep.subr.mxu0 0.0
    %1484 = vmatpush1.msra.mxu0 0.0
    %1485 = vmatprep.subr.mxu0 0.0
    %1486 = vmatpush1.msra.mxu0 0.0
    %1487 = vmatprep.subr.mxu0 0.0
    %1488 = vmatpush1.msra.mxu0 0.0
    %1489 = vmatprep.subr.mxu0 0.0
    %1490 = vmatpush1.msra.mxu0 0.0
    %1491 = vmatprep.subr.mxu0 0.0
    %1492 = vmatpush1.msra.mxu0 0.0
    %1493 = vmatprep.subr.mxu0 0.0
    %1494 = vmatpush1.msra.mxu0 0.0
    %1495 = vmatprep.subr.mxu0 0.0
    %1496 = vmatpush1.msra.mxu0 0.0
    %1497 = vmatprep.subr.mxu0 0.0
    %1498 = vmatpush1.msra.mxu0 0.0
    %1499 = vmatprep.mubr.f32.mxu0 0.0
    %1500 = vmatmul.mubr.f32.gmra.mrb[0].mxu0 %v1429
    %v1501 = vpop.f32.mrb[0].mxu0
    %v1502 = vadd.f32 0.0, %v1501
    %v1503 = vpop.f32.mrb[0].mxu0
    %v1504 = vadd.f32 0.0, %v1503
    %1505 = vdwg.mxu0
    %1506 = vmatprep.subr.mxu0 %v525
    %1507 = vmatpush1.msra.mxu0 %v524
    %1508 = vmatprep.subr.mxu0 %v529
    %1509 = vmatpush1.msra.mxu0 %v528
    %1510 = vmatprep.subr.mxu0 %v533
    %1511 = vmatpush1.msra.mxu0 %v532
    %1512 = vmatprep.subr.mxu0 %v537
    %1513 = vmatpush1.msra.mxu0 %v536
    %1514 = vmatprep.subr.mxu0 %v541
    %1515 = vmatpush1.msra.mxu0 %v540
    %1516 = vmatprep.subr.mxu0 %v545
    %1517 = vmatpush1.msra.mxu0 %v544
    %1518 = vmatprep.subr.mxu0 %v549
    %1519 = vmatpush1.msra.mxu0 %v548
    %1520 = vmatprep.subr.mxu0 %v553
    %1521 = vmatpush1.msra.mxu0 %v552
    %1522 = vmatprep.subr.mxu0 %v557
    %1523 = vmatpush1.msra.mxu0 %v556
    %1524 = vmatprep.subr.mxu0 %v561
    %1525 = vmatpush1.msra.mxu0 %v560
    %1526 = vmatprep.subr.mxu0 %v565
    %1527 = vmatpush1.msra.mxu0 %v564
    %1528 = vmatprep.subr.mxu0 %v569
    %1529 = vmatpush1.msra.mxu0 %v568
    %1530 = vmatprep.subr.mxu0 %v573
    %1531 = vmatpush1.msra.mxu0 %v572
    %1532 = vmatprep.subr.mxu0 %v577
    %1533 = vmatpush1.msra.mxu0 %v576
    %1534 = vmatprep.subr.mxu0 %v581
    %1535 = vmatpush1.msra.mxu0 %v580
    %1536 = vmatprep.subr.mxu0 %v585
    %1537 = vmatpush1.msra.mxu0 %v584
    %1538 = vmatprep.subr.mxu0 0.0
    %1539 = vmatpush1.msra.mxu0 0.0
    %1540 = vmatprep.subr.mxu0 0.0
    %1541 = vmatpush1.msra.mxu0 0.0
    %1542 = vmatprep.subr.mxu0 0.0
    %1543 = vmatpush1.msra.mxu0 0.0
    %1544 = vmatprep.subr.mxu0 0.0
    %1545 = vmatpush1.msra.mxu0 0.0
    %1546 = vmatprep.subr.mxu0 0.0
    %1547 = vmatpush1.msra.mxu0 0.0
    %1548 = vmatprep.subr.mxu0 0.0
    %1549 = vmatpush1.msra.mxu0 0.0
    %1550 = vmatprep.subr.mxu0 0.0
    %1551 = vmatpush1.msra.mxu0 0.0
    %1552 = vmatprep.subr.mxu0 0.0
    %1553 = vmatpush1.msra.mxu0 0.0
    %1554 = vmatprep.subr.mxu0 0.0
    %1555 = vmatpush1.msra.mxu0 0.0
    %1556 = vmatprep.subr.mxu0 0.0
    %1557 = vmatpush1.msra.mxu0 0.0
    %1558 = vmatprep.subr.mxu0 0.0
    %1559 = vmatpush1.msra.mxu0 0.0
    %1560 = vmatprep.subr.mxu0 0.0
    %1561 = vmatpush1.msra.mxu0 0.0
    %1562 = vmatprep.subr.mxu0 0.0
    %1563 = vmatpush1.msra.mxu0 0.0
    %1564 = vmatprep.subr.mxu0 0.0
    %1565 = vmatpush1.msra.mxu0 0.0
    %1566 = vmatprep.subr.mxu0 0.0
    %1567 = vmatpush1.msra.mxu0 0.0
    %1568 = vmatprep.subr.mxu0 0.0
    %1569 = vmatpush1.msra.mxu0 0.0
    %1570 = vmatprep.mubr.f32.mxu0 0.0
    %1571 = vmatmul.mubr.f32.gmra.mrb[0].mxu0 %v1429
    %v1572 = vpop.f32.mrb[0].mxu0
    %v1573 = vadd.f32 0.0, %v1572
    %v1574 = vpop.f32.mrb[0].mxu0
    %v1575 = vadd.f32 0.0, %v1574
    %1576 = vdwg.mxu0
    %v1577 = vadd.f32 %v1431, %v1502
    %v1578 = vadd.f32 %v1432, %v1504
    %v1579 = vadd.f32 %v1433, %v1573
    %v1580 = vadd.f32 %v1434, %v1575
    %v1581 = vmul.f32 %v1577, 0.5
    %v1582 = vtanh.pop %v1581
    %v1583 = vmul.f32 %v1582, 0.5
    %v1584 = vadd.f32 %v1583, 0.5
    %v1585 = vmul.f32 %v1578, 0.5
    %v1586 = vtanh.pop %v1585
    %v1587 = vmul.f32 %v1586, 0.5
    %v1588 = vadd.f32 %v1587, 0.5
    %v1589 = vtanh.pop %v1579
    %v1590 = vmul.f32 %v1580, 0.5
    %v1591 = vtanh.pop %v1590
    %v1592 = vmul.f32 %v1591, 0.5
    %v1593 = vadd.f32 %v1592, 0.5
    %v1594 = vmul.f32 %v1588, %v1427
    %v1595 = vmul.f32 %v1584, %v1589
    %v1596 = vadd.f32 %v1594, %v1595
    %v1597 = vtanh.pop %v1596
    %v1598 = vmul.f32 %v1593, %v1597
    %s1599 = scalar_lea.vmem [#allocation2], 192
    %v1600 = vld [vmem:[%s1599] sm:$0xff]
    %v1601 = vld [vmem:[%s1599 + $0x8] sm:$0xff]
    %v1602 = vld [vmem:[%s1599 + $0x10] sm:$0xff]
    %v1603 = vld [vmem:[%s1599 + $0x18] sm:$0xff]
    %1604 = vmatprep.subr.mxu0 %v523
    %1605 = vmatpush1.msra.mxu0 %v522
    %1606 = vmatprep.subr.mxu0 %v527
    %1607 = vmatpush1.msra.mxu0 %v526
    %1608 = vmatprep.subr.mxu0 %v531
    %1609 = vmatpush1.msra.mxu0 %v530
    %1610 = vmatprep.subr.mxu0 %v535
    %1611 = vmatpush1.msra.mxu0 %v534
    %1612 = vmatprep.subr.mxu0 %v539
    %1613 = vmatpush1.msra.mxu0 %v538
    %1614 = vmatprep.subr.mxu0 %v543
    %1615 = vmatpush1.msra.mxu0 %v542
    %1616 = vmatprep.subr.mxu0 %v547
    %1617 = vmatpush1.msra.mxu0 %v546
    %1618 = vmatprep.subr.mxu0 %v551
    %1619 = vmatpush1.msra.mxu0 %v550
    %1620 = vmatprep.subr.mxu0 %v555
    %1621 = vmatpush1.msra.mxu0 %v554
    %1622 = vmatprep.subr.mxu0 %v559
    %1623 = vmatpush1.msra.mxu0 %v558
    %1624 = vmatprep.subr.mxu0 %v563
    %1625 = vmatpush1.msra.mxu0 %v562
    %1626 = vmatprep.subr.mxu0 %v567
    %1627 = vmatpush1.msra.mxu0 %v566
    %1628 = vmatprep.subr.mxu0 %v571
    %1629 = vmatpush1.msra.mxu0 %v570
    %1630 = vmatprep.subr.mxu0 %v575
    %1631 = vmatpush1.msra.mxu0 %v574
    %1632 = vmatprep.subr.mxu0 %v579
    %1633 = vmatpush1.msra.mxu0 %v578
    %1634 = vmatprep.subr.mxu0 %v583
    %1635 = vmatpush1.msra.mxu0 %v582
    %1636 = vmatprep.subr.mxu0 0.0
    %1637 = vmatpush1.msra.mxu0 0.0
    %1638 = vmatprep.subr.mxu0 0.0
    %1639 = vmatpush1.msra.mxu0 0.0
    %1640 = vmatprep.subr.mxu0 0.0
    %1641 = vmatpush1.msra.mxu0 0.0
    %1642 = vmatprep.subr.mxu0 0.0
    %1643 = vmatpush1.msra.mxu0 0.0
    %1644 = vmatprep.subr.mxu0 0.0
    %1645 = vmatpush1.msra.mxu0 0.0
    %1646 = vmatprep.subr.mxu0 0.0
    %1647 = vmatpush1.msra.mxu0 0.0
    %1648 = vmatprep.subr.mxu0 0.0
    %1649 = vmatpush1.msra.mxu0 0.0
    %1650 = vmatprep.subr.mxu0 0.0
    %1651 = vmatpush1.msra.mxu0 0.0
    %1652 = vmatprep.subr.mxu0 0.0
    %1653 = vmatpush1.msra.mxu0 0.0
    %1654 = vmatprep.subr.mxu0 0.0
    %1655 = vmatpush1.msra.mxu0 0.0
    %1656 = vmatprep.subr.mxu0 0.0
    %1657 = vmatpush1.msra.mxu0 0.0
    %1658 = vmatprep.subr.mxu0 0.0
    %1659 = vmatpush1.msra.mxu0 0.0
    %1660 = vmatprep.subr.mxu0 0.0
    %1661 = vmatpush1.msra.mxu0 0.0
    %1662 = vmatprep.subr.mxu0 0.0
    %1663 = vmatpush1.msra.mxu0 0.0
    %1664 = vmatprep.subr.mxu0 0.0
    %1665 = vmatpush1.msra.mxu0 0.0
    %1666 = vmatprep.subr.mxu0 0.0
    %1667 = vmatpush1.msra.mxu0 0.0
    %1668 = vmatprep.mubr.f32.mxu0 0.0
    %1669 = vmatmul.mubr.f32.gmra.mrb[0].mxu0 %v1598
    %v1670 = vpop.f32.mrb[0].mxu0
    %v1671 = vadd.f32 0.0, %v1670
    %v1672 = vpop.f32.mrb[0].mxu0
    %v1673 = vadd.f32 0.0, %v1672
    %1674 = vdwg.mxu0
    %1675 = vmatprep.subr.mxu0 %v525
    %1676 = vmatpush1.msra.mxu0 %v524
    %1677 = vmatprep.subr.mxu0 %v529
    %1678 = vmatpush1.msra.mxu0 %v528
    %1679 = vmatprep.subr.mxu0 %v533
    %1680 = vmatpush1.msra.mxu0 %v532
    %1681 = vmatprep.subr.mxu0 %v537
    %1682 = vmatpush1.msra.mxu0 %v536
    %1683 = vmatprep.subr.mxu0 %v541
    %1684 = vmatpush1.msra.mxu0 %v540
    %1685 = vmatprep.subr.mxu0 %v545
    %1686 = vmatpush1.msra.mxu0 %v544
    %1687 = vmatprep.subr.mxu0 %v549
    %1688 = vmatpush1.msra.mxu0 %v548
    %1689 = vmatprep.subr.mxu0 %v553
    %1690 = vmatpush1.msra.mxu0 %v552
    %1691 = vmatprep.subr.mxu0 %v557
    %1692 = vmatpush1.msra.mxu0 %v556
    %1693 = vmatprep.subr.mxu0 %v561
    %1694 = vmatpush1.msra.mxu0 %v560
    %1695 = vmatprep.subr.mxu0 %v565
    %1696 = vmatpush1.msra.mxu0 %v564
    %1697 = vmatprep.subr.mxu0 %v569
    %1698 = vmatpush1.msra.mxu0 %v568
    %1699 = vmatprep.subr.mxu0 %v573
    %1700 = vmatpush1.msra.mxu0 %v572
    %1701 = vmatprep.subr.mxu0 %v577
    %1702 = vmatpush1.msra.mxu0 %v576
    %1703 = vmatprep.subr.mxu0 %v581
    %1704 = vmatpush1.msra.mxu0 %v580
    %1705 = vmatprep.subr.mxu0 %v585
    %1706 = vmatpush1.msra.mxu0 %v584
    %1707 = vmatprep.subr.mxu0 0.0
    %1708 = vmatpush1.msra.mxu0 0.0
    %1709 = vmatprep.subr.mxu0 0.0
    %1710 = vmatpush1.msra.mxu0 0.0
    %1711 = vmatprep.subr.mxu0 0.0
    %1712 = vmatpush1.msra.mxu0 0.0
    %1713 = vmatprep.subr.mxu0 0.0
    %1714 = vmatpush1.msra.mxu0 0.0
    %1715 = vmatprep.subr.mxu0 0.0
    %1716 = vmatpush1.msra.mxu0 0.0
    %1717 = vmatprep.subr.mxu0 0.0
    %1718 = vmatpush1.msra.mxu0 0.0
    %1719 = vmatprep.subr.mxu0 0.0
    %1720 = vmatpush1.msra.mxu0 0.0
    %1721 = vmatprep.subr.mxu0 0.0
    %1722 = vmatpush1.msra.mxu0 0.0
    %1723 = vmatprep.subr.mxu0 0.0
    %1724 = vmatpush1.msra.mxu0 0.0
    %1725 = vmatprep.subr.mxu0 0.0
    %1726 = vmatpush1.msra.mxu0 0.0
    %1727 = vmatprep.subr.mxu0 0.0
    %1728 = vmatpush1.msra.mxu0 0.0
    %1729 = vmatprep.subr.mxu0 0.0
    %1730 = vmatpush1.msra.mxu0 0.0
    %1731 = vmatprep.subr.mxu0 0.0
    %1732 = vmatpush1.msra.mxu0 0.0
    %1733 = vmatprep.subr.mxu0 0.0
    %1734 = vmatpush1.msra.mxu0 0.0
    %1735 = vmatprep.subr.mxu0 0.0
    %1736 = vmatpush1.msra.mxu0 0.0
    %1737 = vmatprep.subr.mxu0 0.0
    %1738 = vmatpush1.msra.mxu0 0.0
    %1739 = vmatprep.mubr.f32.mxu0 0.0
    %1740 = vmatmul.mubr.f32.gmra.mrb[0].mxu0 %v1598
    %v1741 = vpop.f32.mrb[0].mxu0
    %v1742 = vadd.f32 0.0, %v1741
    %v1743 = vpop.f32.mrb[0].mxu0
    %v1744 = vadd.f32 0.0, %v1743
    %1745 = vdwg.mxu0
    %v1746 = vadd.f32 %v1600, %v1671
    %v1747 = vadd.f32 %v1601, %v1673
    %v1748 = vadd.f32 %v1602, %v1742
    %v1749 = vadd.f32 %v1603, %v1744
    %v1750 = vmul.f32 %v1746, 0.5
    %v1751 = vtanh.pop %v1750
    %v1752 = vmul.f32 %v1751, 0.5
    %v1753 = vadd.f32 %v1752, 0.5
    %v1754 = vmul.f32 %v1747, 0.5
    %v1755 = vtanh.pop %v1754
    %v1756 = vmul.f32 %v1755, 0.5
    %v1757 = vadd.f32 %v1756, 0.5
    %v1758 = vtanh.pop %v1748
    %v1759 = vmul.f32 %v1749, 0.5
    %v1760 = vtanh.pop %v1759
    %v1761 = vmul.f32 %v1760, 0.5
    %v1762 = vadd.f32 %v1761, 0.5
    %v1763 = vmul.f32 %v1757, %v1596
    %v1764 = vmul.f32 %v1753, %v1758
    %v1765 = vadd.f32 %v1763, %v1764
    %v1766 = vtanh.pop %v1765
    %v1767 = vmul.f32 %v1762, %v1766
    %s1768 = scalar_lea.vmem [#allocation2], 224
    %v1769 = vld [vmem:[%s1768] sm:$0xff]
    %v1770 = vld [vmem:[%s1768 + $0x8] sm:$0xff]
    %v1771 = vld [vmem:[%s1768 + $0x10] sm:$0xff]
    %v1772 = vld [vmem:[%s1768 + $0x18] sm:$0xff]
    %1773 = vmatprep.subr.mxu0 %v523
    %1774 = vmatpush1.msra.mxu0 %v522
    %1775 = vmatprep.subr.mxu0 %v527
    %1776 = vmatpush1.msra.mxu0 %v526
    %1777 = vmatprep.subr.mxu0 %v531
    %1778 = vmatpush1.msra.mxu0 %v530
    %1779 = vmatprep.subr.mxu0 %v535
    %1780 = vmatpush1.msra.mxu0 %v534
    %1781 = vmatprep.subr.mxu0 %v539
    %1782 = vmatpush1.msra.mxu0 %v538
    %1783 = vmatprep.subr.mxu0 %v543
    %1784 = vmatpush1.msra.mxu0 %v542
    %1785 = vmatprep.subr.mxu0 %v547
    %1786 = vmatpush1.msra.mxu0 %v546
    %1787 = vmatprep.subr.mxu0 %v551
    %1788 = vmatpush1.msra.mxu0 %v550
    %1789 = vmatprep.subr.mxu0 %v555
    %1790 = vmatpush1.msra.mxu0 %v554
    %1791 = vmatprep.subr.mxu0 %v559
    %1792 = vmatpush1.msra.mxu0 %v558
    %1793 = vmatprep.subr.mxu0 %v563
    %1794 = vmatpush1.msra.mxu0 %v562
    %1795 = vmatprep.subr.mxu0 %v567
    %1796 = vmatpush1.msra.mxu0 %v566
    %1797 = vmatprep.subr.mxu0 %v571
    %1798 = vmatpush1.msra.mxu0 %v570
    %1799 = vmatprep.subr.mxu0 %v575
    %1800 = vmatpush1.msra.mxu0 %v574
    %1801 = vmatprep.subr.mxu0 %v579
    %1802 = vmatpush1.msra.mxu0 %v578
    %1803 = vmatprep.subr.mxu0 %v583
    %1804 = vmatpush1.msra.mxu0 %v582
    %1805 = vmatprep.subr.mxu0 0.0
    %1806 = vmatpush1.msra.mxu0 0.0
    %1807 = vmatprep.subr.mxu0 0.0
    %1808 = vmatpush1.msra.mxu0 0.0
    %1809 = vmatprep.subr.mxu0 0.0
    %1810 = vmatpush1.msra.mxu0 0.0
    %1811 = vmatprep.subr.mxu0 0.0
    %1812 = vmatpush1.msra.mxu0 0.0
    %1813 = vmatprep.subr.mxu0 0.0
    %1814 = vmatpush1.msra.mxu0 0.0
    %1815 = vmatprep.subr.mxu0 0.0
    %1816 = vmatpush1.msra.mxu0 0.0
    %1817 = vmatprep.subr.mxu0 0.0
    %1818 = vmatpush1.msra.mxu0 0.0
    %1819 = vmatprep.subr.mxu0 0.0
    %1820 = vmatpush1.msra.mxu0 0.0
    %1821 = vmatprep.subr.mxu0 0.0
    %1822 = vmatpush1.msra.mxu0 0.0
    %1823 = vmatprep.subr.mxu0 0.0
    %1824 = vmatpush1.msra.mxu0 0.0
    %1825 = vmatprep.subr.mxu0 0.0
    %1826 = vmatpush1.msra.mxu0 0.0
    %1827 = vmatprep.subr.mxu0 0.0
    %1828 = vmatpush1.msra.mxu0 0.0
    %1829 = vmatprep.subr.mxu0 0.0
    %1830 = vmatpush1.msra.mxu0 0.0
    %1831 = vmatprep.subr.mxu0 0.0
    %1832 = vmatpush1.msra.mxu0 0.0
    %1833 = vmatprep.subr.mxu0 0.0
    %1834 = vmatpush1.msra.mxu0 0.0
    %1835 = vmatprep.subr.mxu0 0.0
    %1836 = vmatpush1.msra.mxu0 0.0
    %1837 = vmatprep.mubr.f32.mxu0 0.0
    %1838 = vmatmul.mubr.f32.gmra.mrb[0].mxu0 %v1767
    %v1839 = vpop.f32.mrb[0].mxu0
    %v1840 = vadd.f32 0.0, %v1839
    %v1841 = vpop.f32.mrb[0].mxu0
    %v1842 = vadd.f32 0.0, %v1841
    %1843 = vdwg.mxu0
    %1844 = vmatprep.subr.mxu0 %v525
    %1845 = vmatpush1.msra.mxu0 %v524
    %1846 = vmatprep.subr.mxu0 %v529
    %1847 = vmatpush1.msra.mxu0 %v528
    %1848 = vmatprep.subr.mxu0 %v533
    %1849 = vmatpush1.msra.mxu0 %v532
    %1850 = vmatprep.subr.mxu0 %v537
    %1851 = vmatpush1.msra.mxu0 %v536
    %1852 = vmatprep.subr.mxu0 %v541
    %1853 = vmatpush1.msra.mxu0 %v540
    %1854 = vmatprep.subr.mxu0 %v545
    %1855 = vmatpush1.msra.mxu0 %v544
    %1856 = vmatprep.subr.mxu0 %v549
    %1857 = vmatpush1.msra.mxu0 %v548
    %1858 = vmatprep.subr.mxu0 %v553
    %1859 = vmatpush1.msra.mxu0 %v552
    %1860 = vmatprep.subr.mxu0 %v557
    %1861 = vmatpush1.msra.mxu0 %v556
    %1862 = vmatprep.subr.mxu0 %v561
    %1863 = vmatpush1.msra.mxu0 %v560
    %1864 = vmatprep.subr.mxu0 %v565
    %1865 = vmatpush1.msra.mxu0 %v564
    %1866 = vmatprep.subr.mxu0 %v569
    %1867 = vmatpush1.msra.mxu0 %v568
    %1868 = vmatprep.subr.mxu0 %v573
    %1869 = vmatpush1.msra.mxu0 %v572
    %1870 = vmatprep.subr.mxu0 %v577
    %1871 = vmatpush1.msra.mxu0 %v576
    %1872 = vmatprep.subr.mxu0 %v581
    %1873 = vmatpush1.msra.mxu0 %v580
    %1874 = vmatprep.subr.mxu0 %v585
    %1875 = vmatpush1.msra.mxu0 %v584
    %1876 = vmatprep.subr.mxu0 0.0
    %1877 = vmatpush1.msra.mxu0 0.0
    %1878 = vmatprep.subr.mxu0 0.0
    %1879 = vmatpush1.msra.mxu0 0.0
    %1880 = vmatprep.subr.mxu0 0.0
    %1881 = vmatpush1.msra.mxu0 0.0
    %1882 = vmatprep.subr.mxu0 0.0
    %1883 = vmatpush1.msra.mxu0 0.0
    %1884 = vmatprep.subr.mxu0 0.0
    %1885 = vmatpush1.msra.mxu0 0.0
    %1886 = vmatprep.subr.mxu0 0.0
    %1887 = vmatpush1.msra.mxu0 0.0
    %1888 = vmatprep.subr.mxu0 0.0
    %1889 = vmatpush1.msra.mxu0 0.0
    %1890 = vmatprep.subr.mxu0 0.0
    %1891 = vmatpush1.msra.mxu0 0.0
    %1892 = vmatprep.subr.mxu0 0.0
    %1893 = vmatpush1.msra.mxu0 0.0
    %1894 = vmatprep.subr.mxu0 0.0
    %1895 = vmatpush1.msra.mxu0 0.0
    %1896 = vmatprep.subr.mxu0 0.0
    %1897 = vmatpush1.msra.mxu0 0.0
    %1898 = vmatprep.subr.mxu0 0.0
    %1899 = vmatpush1.msra.mxu0 0.0
    %1900 = vmatprep.subr.mxu0 0.0
    %1901 = vmatpush1.msra.mxu0 0.0
    %1902 = vmatprep.subr.mxu0 0.0
    %1903 = vmatpush1.msra.mxu0 0.0
    %1904 = vmatprep.subr.mxu0 0.0
    %1905 = vmatpush1.msra.mxu0 0.0
    %1906 = vmatprep.subr.mxu0 0.0
    %1907 = vmatpush1.msra.mxu0 0.0
    %1908 = vmatprep.mubr.f32.mxu0 0.0
    %1909 = vmatmul.mubr.f32.gmra.mrb[0].mxu0 %v1767
    %v1910 = vpop.f32.mrb[0].mxu0
    %v1911 = vadd.f32 0.0, %v1910
    %v1912 = vpop.f32.mrb[0].mxu0
    %v1913 = vadd.f32 0.0, %v1912
    %1914 = vdwg.mxu0
    %v1915 = vadd.f32 %v1769, %v1840
    %v1916 = vadd.f32 %v1770, %v1842
    %v1917 = vadd.f32 %v1771, %v1911
    %v1918 = vadd.f32 %v1772, %v1913
    %v1919 = vmul.f32 %v1915, 0.5
    %v1920 = vtanh.pop %v1919
    %v1921 = vmul.f32 %v1920, 0.5
    %v1922 = vadd.f32 %v1921, 0.5
    %v1923 = vmul.f32 %v1916, 0.5
    %v1924 = vtanh.pop %v1923
    %v1925 = vmul.f32 %v1924, 0.5
    %v1926 = vadd.f32 %v1925, 0.5
    %v1927 = vtanh.pop %v1917
    %v1928 = vmul.f32 %v1918, 0.5
    %v1929 = vtanh.pop %v1928
    %v1930 = vmul.f32 %v1929, 0.5
    %v1931 = vadd.f32 %v1930, 0.5
    %v1932 = vmul.f32 %v1926, %v1765
    %v1933 = vmul.f32 %v1922, %v1927
    %v1934 = vadd.f32 %v1932, %v1933
    %v1935 = vtanh.pop %v1934
    %v1936 = vmul.f32 %v1931, %v1935
    %v1937 = vld [vmem:[#allocation9] sm:$0xff]
    %v1938 = vld [vmem:[#allocation9 + $0x8] sm:$0xff]
    %v1939 = vld [vmem:[#allocation9 + $0x10] sm:$0xff]
    %v1940 = vld [vmem:[#allocation9 + $0x18] sm:$0xff]
    %v1941 = vld [vmem:[#allocation9 + $0x20] sm:$0xff]
    %v1942 = vld [vmem:[#allocation9 + $0x28] sm:$0xff]
    %v1943 = vld [vmem:[#allocation9 + $0x30] sm:$0xff]
    %v1944 = vld [vmem:[#allocation9 + $0x38] sm:$0xff]
    %v1945 = vld [vmem:[#allocation9 + $0x40] sm:$0xff]
    %v1946 = vld [vmem:[#allocation9 + $0x48] sm:$0xff]
    %v1947 = vld [vmem:[#allocation9 + $0x50] sm:$0xff]
    %v1948 = vld [vmem:[#allocation9 + $0x58] sm:$0xff]
    %v1949 = vld [vmem:[#allocation9 + $0x60] sm:$0xff]
    %v1950 = vld [vmem:[#allocation9 + $0x68] sm:$0xff]
    %v1951 = vld [vmem:[#allocation9 + $0x70] sm:$0xff]
    %v1952 = vld [vmem:[#allocation9 + $0x78] sm:$0xff]
    %v1953 = vld [vmem:[%s5] sm:$0x1]
    %v1955 = vlaneseq
    %v1956 = vshrl.u32 %v1955, 7
    %v1957 = vsub.s32 0, %v1956
    %v1958 = vrot.slane %v1953, %v1957
    %1960 = vmatprep.subr.mxu0 0.0
    %1961 = vmatpush1.msra.mxu0 %v1937
    %1962 = vmatprep.subr.mxu0 0.0
    %1963 = vmatpush1.msra.mxu0 %v1938
    %1964 = vmatprep.subr.mxu0 0.0
    %1965 = vmatpush1.msra.mxu0 %v1939
    %1966 = vmatprep.subr.mxu0 0.0
    %1967 = vmatpush1.msra.mxu0 %v1940
    %1968 = vmatprep.subr.mxu0 0.0
    %1969 = vmatpush1.msra.mxu0 %v1941
    %1970 = vmatprep.subr.mxu0 0.0
    %1971 = vmatpush1.msra.mxu0 %v1942
    %1972 = vmatprep.subr.mxu0 0.0
    %1973 = vmatpush1.msra.mxu0 %v1943
    %1974 = vmatprep.subr.mxu0 0.0
    %1975 = vmatpush1.msra.mxu0 %v1944
    %1976 = vmatprep.subr.mxu0 0.0
    %1977 = vmatpush1.msra.mxu0 %v1945
    %1978 = vmatprep.subr.mxu0 0.0
    %1979 = vmatpush1.msra.mxu0 %v1946
    %1980 = vmatprep.subr.mxu0 0.0
    %1981 = vmatpush1.msra.mxu0 %v1947
    %1982 = vmatprep.subr.mxu0 0.0
    %1983 = vmatpush1.msra.mxu0 %v1948
    %1984 = vmatprep.subr.mxu0 0.0
    %1985 = vmatpush1.msra.mxu0 %v1949
    %1986 = vmatprep.subr.mxu0 0.0
    %1987 = vmatpush1.msra.mxu0 %v1950
    %1988 = vmatprep.subr.mxu0 0.0
    %1989 = vmatpush1.msra.mxu0 %v1951
    %1990 = vmatprep.subr.mxu0 0.0
    %1991 = vmatpush1.msra.mxu0 %v1952
    %1992 = vmatprep.subr.mxu0 0.0
    %1993 = vmatpush1.msra.mxu0 0.0
    %1994 = vmatprep.subr.mxu0 0.0
    %1995 = vmatpush1.msra.mxu0 0.0
    %1996 = vmatprep.subr.mxu0 0.0
    %1997 = vmatpush1.msra.mxu0 0.0
    %1998 = vmatprep.subr.mxu0 0.0
    %1999 = vmatpush1.msra.mxu0 0.0
    %2000 = vmatprep.subr.mxu0 0.0
    %2001 = vmatpush1.msra.mxu0 0.0
    %2002 = vmatprep.subr.mxu0 0.0
    %2003 = vmatpush1.msra.mxu0 0.0
    %2004 = vmatprep.subr.mxu0 0.0
    %2005 = vmatpush1.msra.mxu0 0.0
    %2006 = vmatprep.subr.mxu0 0.0
    %2007 = vmatpush1.msra.mxu0 0.0
    %2008 = vmatprep.subr.mxu0 0.0
    %2009 = vmatpush1.msra.mxu0 0.0
    %2010 = vmatprep.subr.mxu0 0.0
    %2011 = vmatpush1.msra.mxu0 0.0
    %2012 = vmatprep.subr.mxu0 0.0
    %2013 = vmatpush1.msra.mxu0 0.0
    %2014 = vmatprep.subr.mxu0 0.0
    %2015 = vmatpush1.msra.mxu0 0.0
    %2016 = vmatprep.subr.mxu0 0.0
    %2017 = vmatpush1.msra.mxu0 0.0
    %2018 = vmatprep.subr.mxu0 0.0
    %2019 = vmatpush1.msra.mxu0 0.0
    %2020 = vmatprep.subr.mxu0 0.0
    %2021 = vmatpush1.msra.mxu0 0.0
    %2022 = vmatprep.subr.mxu0 0.0
    %2023 = vmatpush1.msra.mxu0 0.0
    %2024 = vmatprep.mubr.f32.mxu0 0.0
    %2025 = vmatmul.mubr.f32.gmra.mrb[0].mxu0 %v1936
    %v2026 = vpop.f32.mrb[0].mxu0
    %v2027 = vadd.f32 %v1958, %v2026
    %v2028 = vpop.f32.mrb[0].mxu0
    %2029 = vdwg.mxu0
    %v2030 = vmax.f32 %v2027, 0.0
    %v2031 = vld [vmem:[#allocation11] sm:$0xff]
    %v2032 = vld [vmem:[#allocation11 + $0x8] sm:$0xff]
    %v2033 = vld [vmem:[#allocation11 + $0x10] sm:$0xff]
    %v2034 = vld [vmem:[#allocation11 + $0x18] sm:$0xff]
    %v2035 = vld [vmem:[#allocation11 + $0x20] sm:$0xff]
    %v2036 = vld [vmem:[#allocation11 + $0x28] sm:$0xff]
    %v2037 = vld [vmem:[#allocation11 + $0x30] sm:$0xff]
    %v2038 = vld [vmem:[#allocation11 + $0x38] sm:$0xff]
    %v2039 = vld [vmem:[#allocation11 + $0x40] sm:$0xff]
    %v2040 = vld [vmem:[#allocation11 + $0x48] sm:$0xff]
    %v2041 = vld [vmem:[#allocation11 + $0x50] sm:$0xff]
    %v2042 = vld [vmem:[#allocation11 + $0x58] sm:$0xff]
    %v2043 = vld [vmem:[#allocation11 + $0x60] sm:$0xff]
    %v2044 = vld [vmem:[#allocation11 + $0x68] sm:$0xff]
    %v2045 = vld [vmem:[#allocation11 + $0x70] sm:$0xff]
    %v2046 = vld [vmem:[#allocation11 + $0x78] sm:$0xff]
    %v2047 = vld [vmem:[%s7] sm:$0x1]
    %v2049 = vlaneseq
    %v2050 = vshrl.u32 %v2049, 7
    %v2051 = vsub.s32 0, %v2050
    %v2052 = vrot.slane %v2047, %v2051
    %2054 = vmatprep.subr.mxu0 0.0
    %2055 = vmatpush1.msra.mxu0 %v2031
    %2056 = vmatprep.subr.mxu0 0.0
    %2057 = vmatpush1.msra.mxu0 %v2032
    %2058 = vmatprep.subr.mxu0 0.0
    %2059 = vmatpush1.msra.mxu0 %v2033
    %2060 = vmatprep.subr.mxu0 0.0
    %2061 = vmatpush1.msra.mxu0 %v2034
    %2062 = vmatprep.subr.mxu0 0.0
    %2063 = vmatpush1.msra.mxu0 %v2035
    %2064 = vmatprep.subr.mxu0 0.0
    %2065 = vmatpush1.msra.mxu0 %v2036
    %2066 = vmatprep.subr.mxu0 0.0
    %2067 = vmatpush1.msra.mxu0 %v2037
    %2068 = vmatprep.subr.mxu0 0.0
    %2069 = vmatpush1.msra.mxu0 %v2038
    %2070 = vmatprep.subr.mxu0 0.0
    %2071 = vmatpush1.msra.mxu0 %v2039
    %2072 = vmatprep.subr.mxu0 0.0
    %2073 = vmatpush1.msra.mxu0 %v2040
    %2074 = vmatprep.subr.mxu0 0.0
    %2075 = vmatpush1.msra.mxu0 %v2041
    %2076 = vmatprep.subr.mxu0 0.0
    %2077 = vmatpush1.msra.mxu0 %v2042
    %2078 = vmatprep.subr.mxu0 0.0
    %2079 = vmatpush1.msra.mxu0 %v2043
    %2080 = vmatprep.subr.mxu0 0.0
    %2081 = vmatpush1.msra.mxu0 %v2044
    %2082 = vmatprep.subr.mxu0 0.0
    %2083 = vmatpush1.msra.mxu0 %v2045
    %2084 = vmatprep.subr.mxu0 0.0
    %2085 = vmatpush1.msra.mxu0 %v2046
    %2086 = vmatprep.subr.mxu0 0.0
    %2087 = vmatpush1.msra.mxu0 0.0
    %2088 = vmatprep.subr.mxu0 0.0
    %2089 = vmatpush1.msra.mxu0 0.0
    %2090 = vmatprep.subr.mxu0 0.0
    %2091 = vmatpush1.msra.mxu0 0.0
    %2092 = vmatprep.subr.mxu0 0.0
    %2093 = vmatpush1.msra.mxu0 0.0
    %2094 = vmatprep.subr.mxu0 0.0
    %2095 = vmatpush1.msra.mxu0 0.0
    %2096 = vmatprep.subr.mxu0 0.0
    %2097 = vmatpush1.msra.mxu0 0.0
    %2098 = vmatprep.subr.mxu0 0.0
    %2099 = vmatpush1.msra.mxu0 0.0
    %2100 = vmatprep.subr.mxu0 0.0
    %2101 = vmatpush1.msra.mxu0 0.0
    %2102 = vmatprep.subr.mxu0 0.0
    %2103 = vmatpush1.msra.mxu0 0.0
    %2104 = vmatprep.subr.mxu0 0.0
    %2105 = vmatpush1.msra.mxu0 0.0
    %2106 = vmatprep.subr.mxu0 0.0
    %2107 = vmatpush1.msra.mxu0 0.0
    %2108 = vmatprep.subr.mxu0 0.0
    %2109 = vmatpush1.msra.mxu0 0.0
    %2110 = vmatprep.subr.mxu0 0.0
    %2111 = vmatpush1.msra.mxu0 0.0
    %2112 = vmatprep.subr.mxu0 0.0
    %2113 = vmatpush1.msra.mxu0 0.0
    %2114 = vmatprep.subr.mxu0 0.0
    %2115 = vmatpush1.msra.mxu0 0.0
    %2116 = vmatprep.subr.mxu0 0.0
    %2117 = vmatpush1.msra.mxu0 0.0
    %2118 = vmatprep.mubr.f32.mxu0 0.0
    %2119 = vmatmul.mubr.f32.gmra.mrb[0].mxu0 %v2030
    %v2120 = vpop.f32.mrb[0].mxu0
    %v2121 = vadd.f32 %v2052, %v2120
    %v2122 = vpop.f32.mrb[0].mxu0
    %2123 = vdwg.mxu0
    %2124 = vmax.xlane.f32.xlu0 %v2121
    %v2125 = vpop.xlane.xlu0 %2124
    %v2126 = vsub.f32 %v2121, %v2125
    %v2127 = vmul.f32 %v2126, 1.442695
    %v2128 = vpow.pop %v2127
    %2129 = vadd.xlane.f32.xlu0 %v2128
    %v2130 = vpop.xlane.xlu0 %2129
    %v2131 = vrcp.pop %v2130
    %v2132 = vmul.f32 %v2128, %v2131
    %2133 = vst [vmem:[#allocation12] sm:$0xff] %v2132
    // Predicated region
    $region54: #{tpu_custom_call.1} parent=1 // pred_check
      _
    $region55: #{tpu_custom_call.1} parent=1 // pred_check_branch
      %2135 = sbr.rel (0) target = $region57
    $region56: #{tpu_custom_call.1} parent=1 // pred_region
      %s2137 = ssub.s32 128, 128
      %2138 = vsyncadd [#allocation5], %s2137
      %s2140 = sshll.u32 [#allocation12], 4
      %s2141 = int_to_ptr.vmem [resolvable:$true] %s2140
      %2143 = dma.vmem_to_hbm [thread:$0]  %s2141, 128, %s8, [#allocation5]
    $region57: #{tpu_custom_call.1} parent=1 // pred_fallthru
      _
    // Predicated region
    $region58: #{tpu_custom_call.1} parent=1 // pred_check
      _
    $region59: #{tpu_custom_call.1} parent=1 // pred_check_branch
      %2145 = sbr.rel (0) target = $region61
    $region60: #{tpu_custom_call.1} parent=1 // pred_region
      %2146 = dma.done [#allocation5], 128
    $region61: #{tpu_custom_call.1} parent=1 // pred_fallthru
      _
    %2147 = vsyncpa [#allocation4], 1
    %2148 = vsyncpa [#allocation7], 1
    %2149 = vsyncpa [#allocation10], 1
    %2150 = vsyncpa [#allocation5], 1

</llo_original>
